<compile_context>
chip_gen: v7x
topology: tpu7x:2x2x1
jax: 0.10.0
libtpu: 0.0.40
codegen_flags: <defaults>
</compile_context>

<pallas_src>
import jax
import jax.numpy as jnp
from jax import lax
from jax.experimental import pallas as pl
from jax.experimental.pallas import tpu as pltpu

NUM_CLASSES = 10
LAMBDA_COORD = 5.0
LAMBDA_NOOBJ = 0.5
BLOCK = 5 + NUM_CLASSES            # 15 slots per anchor/grid group
NUM_GROUPS = 4                     # channels = 4 * 15 = 60
RAW_ROWS = 2 * NUM_GROUPS          # fused rows (batch*4 + group) with batch < 2
# Per-block element budget (rows * lanes).  With f32 and the 15->16 sublane pad
# this keeps {2 inputs x 2 pipeline buffers + scratch} under ~20 MiB of VMEM.
DEFAULT_MAX_BLOCK_ELEMS = 48 * 1024


def _yolo_loss_kernel(pred_ref, tgt_ref, out_ref,
                      acc_obj_ref, acc_coord_ref, acc_cls_ref):
    c = pl.program_id(0)               # parallel-split (TensorCore) index
    i = pl.program_id(1)               # row-block index within the split
    n_i = pl.num_programs(1)

    @pl.when(i == 0)
    def _():
        acc_obj_ref[...] = jnp.zeros_like(acc_obj_ref)
        acc_coord_ref[...] = jnp.zeros_like(acc_coord_ref)
        acc_cls_ref[...] = jnp.zeros_like(acc_cls_ref)

    # Block: (r_chunk, 15, L) where rows = fused (batch, group) axis, L = S*S.
    p = pred_ref[...].astype(jnp.float32)
    t = tgt_ref[...].astype(jnp.float32)
    r_chunk = p.shape[0]
    row_start = (c * n_i + i) * r_chunk        # first global row of this block

    # --- Objectness (slot 0): masks on the target, lambda folded in ----------
    po = p[:, 0:1, :]
    to = t[:, 0:1, :]
    d_obj = po - to
    # NOTE: exact `> 0` / `== 0` mirrors the PyTorch reference (so -0.0 and tiny
    # negative targets fall into the same branches as in torch).
    obj_c = jnp.where(to > 0.0, d_obj * d_obj,
                      jnp.where(to == 0.0, LAMBDA_NOOBJ * (po * po), 0.0))

    # --- Localization (slots 1..4) --------------------------------------------
    # Reference: pred_coords[:2] (batch rows 0,1)  -> raw squared diff
    #            pred_coords[2:] (batch rows >= 2) -> squared diff of sqrt's
    pc = p[:, 1:5, :]
    tc = t[:, 1:5, :]
    d_raw = pc - tc
    # NOTE: sqrt(negative) -> NaN exactly as torch.sqrt in the reference; the
    # where-select keeps it from leaking into the raw-diff rows.
    d_sqrt = jnp.sqrt(pc) - jnp.sqrt(tc)
    rows = row_start + lax.broadcasted_iota(jnp.int32, pc.shape, 0)
    coord_c = LAMBDA_COORD * jnp.where(rows < RAW_ROWS,
                                       d_raw * d_raw, d_sqrt * d_sqrt)

    # --- Class probabilities (slots 5..14) -------------------------------------
    d_cls = p[:, 5:, :] - t[:, 5:, :]
    cls_c = d_cls * d_cls

    # Element-wise accumulation only: no cross-lane reduce on the hot path.
    acc_obj_ref[...] += obj_c
    acc_coord_ref[...] += coord_c
    acc_cls_ref[...] += cls_c

    # Final step of this split: one deferred reduce + one store of this split's
    # partial (broadcast across an (8,128) tile; wrapper picks [0,0]).
    @pl.when(i == n_i - 1)
    def _():
        total = (jnp.sum(acc_obj_ref[...])
                 + jnp.sum(acc_coord_ref[...])
                 + jnp.sum(acc_cls_ref[...]))
        out_ref[...] = jnp.zeros_like(out_ref) + total


def yolo_loss(predictions, targets, *, max_block_elems=DEFAULT_MAX_BLOCK_ELEMS):
    """predictions, targets: (B, 60, S, S) -> scalar float32 YOLO loss."""
    B, C, S, S2 = predictions.shape
    assert C == NUM_GROUPS * BLOCK and S == S2
    R_total = B * NUM_GROUPS
    L = S * S

    # Free relayout: channel index = group*15 + slot, so this is a pure reshape
    # (no transpose, no extra HBM read/write of the inputs).
    p = predictions.reshape(R_total, BLOCK, L)
    t = targets.reshape(R_total, BLOCK, L)

    # Largest divisor of the row count whose block fits the element budget
    # (falls back to single-row blocks for very large S).
    r_chunk = 1
    for d in range(R_total, 0, -1):
        if R_total % d == 0 and d * L <= max_block_elems:
            r_chunk = d
            break
    n_blocks = R_total // r_chunk
    nsplit = 2 if (n_blocks >= 2 and n_blocks % 2 == 0) else 1
    bps = n_blocks // nsplit           # row blocks per split

    # VMEM: 2 inputs x 2 pipeline buffers x block + ~2 blocks of f32 scratch.
    block_bytes = r_chunk * 16 * L * 4          # 15 sublanes pad to 16
    vmem_limit = int(min(64 * 2 ** 20, max(32 * 2 ** 20, 8 * block_bytes)))

    out = pl.pallas_call(
        _yolo_loss_kernel,
        out_shape=jax.ShapeDtypeStruct((nsplit, 8, 128), jnp.float32),
        grid_spec=pltpu.PrefetchScalarGridSpec(
            num_scalar_prefetch=0,
            grid=(nsplit, bps),
            in_specs=[
                pl.BlockSpec((r_chunk, BLOCK, L), lambda c, i: (c * bps + i, 0, 0)),
                pl.BlockSpec((r_chunk, BLOCK, L), lambda c, i: (c * bps + i, 0, 0)),
            ],
            out_specs=pl.BlockSpec((1, 8, 128), lambda c, i: (c, 0, 0)),
            scratch_shapes=[
                pltpu.VMEM((r_chunk, 1, L), jnp.float32),
                pltpu.VMEM((r_chunk, 4, L), jnp.float32),
                pltpu.VMEM((r_chunk, NUM_CLASSES, L), jnp.float32),
            ],
        ),
        compiler_params=pltpu.CompilerParams(
            dimension_semantics=("parallel", "arbitrary"),
            vmem_limit_bytes=vmem_limit,
        ),
    )(p, t)
    # One partial per split; sum them on the host side of the call.
    return jnp.sum(out[:, 0, 0])


def yolo_loss_ref(pred, tgt):
    """Pure-JAX reference mirroring the PyTorch forward exactly."""
    obj_idx = jnp.array([0, 15, 30, 45])
    coord_idx = jnp.array([1, 2, 3, 4, 16, 17, 18, 19,
                           31, 32, 33, 34, 46, 47, 48, 49])
    class_idx = jnp.concatenate([jnp.arange(5, 15), jnp.arange(20, 30),
                                 jnp.arange(35, 45), jnp.arange(50, 60)])
    pc, tc = pred[:, coord_idx], tgt[:, coord_idx]
    po, to = pred[:, obj_idx], tgt[:, obj_idx]
    pcl, tcl = pred[:, class_idx], tgt[:, class_idx]

    loc = jnp.sum((pc[:2] - tc[:2]) ** 2)
    loc += jnp.sum((jnp.sqrt(pc[2:]) - jnp.sqrt(tc[2:])) ** 2)
    conf_obj = jnp.sum(jnp.where(to > 0, (po - to) ** 2, 0.0))
    conf_noobj = jnp.sum(jnp.where(to == 0, po ** 2, 0.0))
    cls = jnp.sum((pcl - tcl) ** 2)
    return LAMBDA_COORD * loc + conf_obj + LAMBDA_NOOBJ * conf_noobj + cls


if __name__ == "__main__":
    # B=4 exercises both the [:2] (raw) and [2:] (sqrt) coord branches.
    B, C, S = 4, NUM_GROUPS * BLOCK, 16
    key = jax.random.PRNGKey(0)
    kp, kt = jax.random.split(key)
    # Non-negative values keep the sqrt branch well defined (as for YOLO box
    # sizes); some target entries forced to exactly 0 to hit the no-object path.
    predictions = jax.random.uniform(kp, (B, C, S, S), dtype=jnp.float32)
    targets_raw = jax.random.uniform(kt, (B, C, S, S), dtype=jnp.float32)
    targets = jnp.where(targets_raw < 0.3, 0.0, targets_raw)

    ref = yolo_loss_ref(predictions, targets)

    # Default path (single block for this small shape).
    loss = jax.block_until_ready(yolo_loss(predictions, targets))
    assert jnp.allclose(loss, ref, rtol=1e-4, atol=1e-2), (loss, ref)

    # Small forced block size: exercises multi-step accumulation and the 2-way
    # parallel split with per-split partial outputs.
    loss_chunked = jax.block_until_ready(
        yolo_loss(predictions, targets, max_block_elems=4 * S * S))
    assert jnp.allclose(loss_chunked, ref, rtol=1e-4, atol=1e-2), (loss_chunked, ref)

    print("KERNEL_OK")
</pallas_src>

<mosaic_0001>
module attributes {stable_mosaic.version = 11 : i64} {
  func.func @_yolo_loss_kernel(%arg0: i32, %arg1: i32, %arg2: memref<16x15x256xf32, #tpu.memory_space<vmem>>, %arg3: memref<16x15x256xf32, #tpu.memory_space<vmem>>, %arg4: memref<1x8x128xf32, #tpu.memory_space<vmem>>, %arg5: memref<16x1x256xf32, #tpu.memory_space<vmem>>, %arg6: memref<16x4x256xf32, #tpu.memory_space<vmem>>, %arg7: memref<16x10x256xf32, #tpu.memory_space<vmem>>) attributes {dimension_semantics = [#tpu.dimension_semantics<parallel>, #tpu.dimension_semantics<arbitrary>], iteration_bounds = array<i64: 1, 1>, scalar_prefetch = 0 : i64, scratch_operands = 3 : i64, tpu.core_type = #tpu.core_type<tc>, window_params = [{transform_indices = @transform_0, window_bounds = array<i64: 16, 15, 256>}, {transform_indices = @transform_1, window_bounds = array<i64: 16, 15, 256>}, {transform_indices = @transform_2, window_bounds = array<i64: 1, 8, 128>}]} {
    %c0_i32 = arith.constant 0 : i32
    %0 = arith.cmpi eq, %arg1, %c0_i32 : i32
    %1 = arith.extui %0 : i1 to i32
    %c0_i32_0 = arith.constant 0 : i32
    %2 = arith.cmpi ne, %1, %c0_i32_0 : i32
    scf.if %2 {
      %cst_30 = arith.constant 0.000000e+00 : f32
      %54 = vector.broadcast %cst_30 : f32 to vector<16x1x256xf32>
      %c0_31 = arith.constant 0 : index
      %c0_32 = arith.constant 0 : index
      %c0_33 = arith.constant 0 : index
      %55 = vector.load %arg5[%c0_31, %c0_32, %c0_33] : memref<16x1x256xf32, #tpu.memory_space<vmem>>, vector<16x1x256xf32>
      tpu.vector_store %arg5[%c0_31, %c0_32, %c0_33], %54 {strides = array<i32>} : memref<16x1x256xf32, #tpu.memory_space<vmem>>, vector<16x1x256xf32>,
      %cst_34 = arith.constant 0.000000e+00 : f32
      %56 = vector.broadcast %cst_34 : f32 to vector<16x4x256xf32>
      %c0_35 = arith.constant 0 : index
      %c0_36 = arith.constant 0 : index
      %c0_37 = arith.constant 0 : index
      %57 = vector.load %arg6[%c0_35, %c0_36, %c0_37] : memref<16x4x256xf32, #tpu.memory_space<vmem>>, vector<16x4x256xf32>
      tpu.vector_store %arg6[%c0_35, %c0_36, %c0_37], %56 {strides = array<i32>} : memref<16x4x256xf32, #tpu.memory_space<vmem>>, vector<16x4x256xf32>,
      %cst_38 = arith.constant 0.000000e+00 : f32
      %58 = vector.broadcast %cst_38 : f32 to vector<16x10x256xf32>
      %c0_39 = arith.constant 0 : index
      %c0_40 = arith.constant 0 : index
      %c0_41 = arith.constant 0 : index
      %59 = vector.load %arg7[%c0_39, %c0_40, %c0_41] : memref<16x10x256xf32, #tpu.memory_space<vmem>>, vector<16x10x256xf32>
      tpu.vector_store %arg7[%c0_39, %c0_40, %c0_41], %58 {strides = array<i32>} : memref<16x10x256xf32, #tpu.memory_space<vmem>>, vector<16x10x256xf32>,
    } else {
    }
    %c0 = arith.constant 0 : index
    %c0_1 = arith.constant 0 : index
    %c0_2 = arith.constant 0 : index
    %3 = vector.load %arg2[%c0, %c0_1, %c0_2] : memref<16x15x256xf32, #tpu.memory_space<vmem>>, vector<16x15x256xf32>
    %c0_3 = arith.constant 0 : index
    %c0_4 = arith.constant 0 : index
    %c0_5 = arith.constant 0 : index
    %4 = vector.load %arg3[%c0_3, %c0_4, %c0_5] : memref<16x15x256xf32, #tpu.memory_space<vmem>>, vector<16x15x256xf32>
    %c1_i32 = arith.constant 1 : i32
    %5 = arith.muli %arg0, %c1_i32 : i32
    %6 = arith.addi %5, %arg1 : i32
    %c16_i32 = arith.constant 16 : i32
    %7 = arith.muli %6, %c16_i32 : i32
    %8 = vector.extract_strided_slice %3 {offsets = [0, 0, 0], sizes = [16, 1, 256], strides = [1, 1, 1]} : vector<16x15x256xf32> to vector<16x1x256xf32>
    %9 = vector.extract_strided_slice %4 {offsets = [0, 0, 0], sizes = [16, 1, 256], strides = [1, 1, 1]} : vector<16x15x256xf32> to vector<16x1x256xf32>
    %10 = arith.subf %8, %9 : vector<16x1x256xf32>
    %cst = arith.constant 0.000000e+00 : f32
    %11 = vector.broadcast %cst : f32 to vector<16x1x256xf32>
    %12 = arith.cmpf ogt, %9, %11 : vector<16x1x256xf32>
    %13 = arith.mulf %10, %10 : vector<16x1x256xf32>
    %cst_6 = arith.constant 0.000000e+00 : f32
    %14 = vector.broadcast %cst_6 : f32 to vector<16x1x256xf32>
    %15 = arith.cmpf oeq, %9, %14 : vector<16x1x256xf32>
    %16 = arith.mulf %8, %8 : vector<16x1x256xf32>
    %cst_7 = arith.constant 5.000000e-01 : f32
    %17 = vector.broadcast %cst_7 : f32 to vector<16x1x256xf32>
    %18 = arith.mulf %17, %16 : vector<16x1x256xf32>
    %cst_8 = arith.constant 0.000000e+00 : f32
    %19 = vector.broadcast %cst_8 : f32 to vector<16x1x256xf32>
    %20 = arith.select %15, %18, %19 : vector<16x1x256xi1>, vector<16x1x256xf32>
    %21 = arith.select %12, %13, %20 : vector<16x1x256xi1>, vector<16x1x256xf32>
    %22 = vector.extract_strided_slice %3 {offsets = [0, 1, 0], sizes = [16, 4, 256], strides = [1, 1, 1]} : vector<16x15x256xf32> to vector<16x4x256xf32>
    %23 = vector.extract_strided_slice %4 {offsets = [0, 1, 0], sizes = [16, 4, 256], strides = [1, 1, 1]} : vector<16x15x256xf32> to vector<16x4x256xf32>
    %24 = arith.subf %22, %23 : vector<16x4x256xf32>
    %25 = math.sqrt %22 : vector<16x4x256xf32>
    %26 = math.sqrt %23 : vector<16x4x256xf32>
    %27 = arith.subf %25, %26 : vector<16x4x256xf32>
    %28 = tpu.iota {dimensions = array<i32: 0>} : vector<16x4x256xi32>
    %29 = vector.broadcast %7 : i32 to vector<16x4x256xi32>
    %30 = arith.addi %29, %28 : vector<16x4x256xi32>
    %c8_i32 = arith.constant 8 : i32
    %31 = vector.broadcast %c8_i32 : i32 to vector<16x4x256xi32>
    %32 = arith.cmpi slt, %30, %31 : vector<16x4x256xi32>
    %33 = arith.mulf %24, %24 : vector<16x4x256xf32>
    %34 = arith.mulf %27, %27 : vector<16x4x256xf32>
    %35 = arith.select %32, %33, %34 : vector<16x4x256xi1>, vector<16x4x256xf32>
    %cst_9 = arith.constant 5.000000e+00 : f32
    %36 = vector.broadcast %cst_9 : f32 to vector<16x4x256xf32>
    %37 = arith.mulf %36, %35 : vector<16x4x256xf32>
    %38 = vector.extract_strided_slice %3 {offsets = [0, 5, 0], sizes = [16, 10, 256], strides = [1, 1, 1]} : vector<16x15x256xf32> to vector<16x10x256xf32>
    %39 = vector.extract_strided_slice %4 {offsets = [0, 5, 0], sizes = [16, 10, 256], strides = [1, 1, 1]} : vector<16x15x256xf32> to vector<16x10x256xf32>
    %40 = arith.subf %38, %39 : vector<16x10x256xf32>
    %41 = arith.mulf %40, %40 : vector<16x10x256xf32>
    %c0_10 = arith.constant 0 : index
    %c0_11 = arith.constant 0 : index
    %c0_12 = arith.constant 0 : index
    %42 = vector.load %arg5[%c0_10, %c0_11, %c0_12] : memref<16x1x256xf32, #tpu.memory_space<vmem>>, vector<16x1x256xf32>
    %43 = arith.addf %42, %21 : vector<16x1x256xf32>
    %c0_13 = arith.constant 0 : index
    %c0_14 = arith.constant 0 : index
    %c0_15 = arith.constant 0 : index
    %44 = vector.load %arg5[%c0_13, %c0_14, %c0_15] : memref<16x1x256xf32, #tpu.memory_space<vmem>>, vector<16x1x256xf32>
    tpu.vector_store %arg5[%c0_13, %c0_14, %c0_15], %43 {strides = array<i32>} : memref<16x1x256xf32, #tpu.memory_space<vmem>>, vector<16x1x256xf32>,
    %c0_16 = arith.constant 0 : index
    %c0_17 = arith.constant 0 : index
    %c0_18 = arith.constant 0 : index
    %45 = vector.load %arg6[%c0_16, %c0_17, %c0_18] : memref<16x4x256xf32, #tpu.memory_space<vmem>>, vector<16x4x256xf32>
    %46 = arith.addf %45, %37 : vector<16x4x256xf32>
    %c0_19 = arith.constant 0 : index
    %c0_20 = arith.constant 0 : index
    %c0_21 = arith.constant 0 : index
    %47 = vector.load %arg6[%c0_19, %c0_20, %c0_21] : memref<16x4x256xf32, #tpu.memory_space<vmem>>, vector<16x4x256xf32>
    tpu.vector_store %arg6[%c0_19, %c0_20, %c0_21], %46 {strides = array<i32>} : memref<16x4x256xf32, #tpu.memory_space<vmem>>, vector<16x4x256xf32>,
    %c0_22 = arith.constant 0 : index
    %c0_23 = arith.constant 0 : index
    %c0_24 = arith.constant 0 : index
    %48 = vector.load %arg7[%c0_22, %c0_23, %c0_24] : memref<16x10x256xf32, #tpu.memory_space<vmem>>, vector<16x10x256xf32>
    %49 = arith.addf %48, %41 : vector<16x10x256xf32>
    %c0_25 = arith.constant 0 : index
    %c0_26 = arith.constant 0 : index
    %c0_27 = arith.constant 0 : index
    %50 = vector.load %arg7[%c0_25, %c0_26, %c0_27] : memref<16x10x256xf32, #tpu.memory_space<vmem>>, vector<16x10x256xf32>
    tpu.vector_store %arg7[%c0_25, %c0_26, %c0_27], %49 {strides = array<i32>} : memref<16x10x256xf32, #tpu.memory_space<vmem>>, vector<16x10x256xf32>,
    %c0_i32_28 = arith.constant 0 : i32
    %51 = arith.cmpi eq, %arg1, %c0_i32_28 : i32
    %52 = arith.extui %51 : i1 to i32
    %c0_i32_29 = arith.constant 0 : i32
    %53 = arith.cmpi ne, %52, %c0_i32_29 : i32
    scf.if %53 {
      %c0_30 = arith.constant 0 : index
      %c0_31 = arith.constant 0 : index
      %c0_32 = arith.constant 0 : index
      %54 = vector.load %arg5[%c0_30, %c0_31, %c0_32] : memref<16x1x256xf32, #tpu.memory_space<vmem>>, vector<16x1x256xf32>
      %55 = vector.shape_cast %54 : vector<16x1x256xf32> to vector<1x16x1x256xf32>
      %cst_33 = arith.constant dense<0.000000e+00> : vector<1xf32>
      %56 = vector.multi_reduction <add>, %55, %cst_33 [1, 2, 3] : vector<1x16x1x256xf32> to vector<1xf32>
      %57 = vector.shape_cast %56 : vector<1xf32> to vector<1x1x1x1xf32>
      %58 = vector.extract %57[0, 0, 0, 0] : f32 from vector<1x1x1x1xf32>
      %c0_34 = arith.constant 0 : index
      %c0_35 = arith.constant 0 : index
      %c0_36 = arith.constant 0 : index
      %59 = vector.load %arg6[%c0_34, %c0_35, %c0_36] : memref<16x4x256xf32, #tpu.memory_space<vmem>>, vector<16x4x256xf32>
      %60 = vector.shape_cast %59 : vector<16x4x256xf32> to vector<1x16x4x256xf32>
      %cst_37 = arith.constant dense<0.000000e+00> : vector<1xf32>
      %61 = vector.multi_reduction <add>, %60, %cst_37 [1, 2, 3] : vector<1x16x4x256xf32> to vector<1xf32>
      %62 = vector.shape_cast %61 : vector<1xf32> to vector<1x1x1x1xf32>
      %63 = vector.extract %62[0, 0, 0, 0] : f32 from vector<1x1x1x1xf32>
      %64 = arith.addf %58, %63 : f32
      %c0_38 = arith.constant 0 : index
      %c0_39 = arith.constant 0 : index
      %c0_40 = arith.constant 0 : index
      %65 = vector.load %arg7[%c0_38, %c0_39, %c0_40] : memref<16x10x256xf32, #tpu.memory_space<vmem>>, vector<16x10x256xf32>
      %66 = vector.shape_cast %65 : vector<16x10x256xf32> to vector<1x16x10x256xf32>
      %cst_41 = arith.constant dense<0.000000e+00> : vector<1xf32>
      %67 = vector.multi_reduction <add>, %66, %cst_41 [1, 2, 3] : vector<1x16x10x256xf32> to vector<1xf32>
      %68 = vector.shape_cast %67 : vector<1xf32> to vector<1x1x1x1xf32>
      %69 = vector.extract %68[0, 0, 0, 0] : f32 from vector<1x1x1x1xf32>
      %70 = arith.addf %64, %69 : f32
      %cst_42 = arith.constant 0.000000e+00 : f32
      %71 = vector.broadcast %cst_42 : f32 to vector<1x8x128xf32>
      %72 = vector.broadcast %70 : f32 to vector<1x8x128xf32>
      %73 = arith.addf %71, %72 : vector<1x8x128xf32>
      %c0_43 = arith.constant 0 : index
      %c0_44 = arith.constant 0 : index
      %c0_45 = arith.constant 0 : index
      %74 = vector.load %arg4[%c0_43, %c0_44, %c0_45] : memref<1x8x128xf32, #tpu.memory_space<vmem>>, vector<1x8x128xf32>
      tpu.vector_store %arg4[%c0_43, %c0_44, %c0_45], %73 {strides = array<i32>} : memref<1x8x128xf32, #tpu.memory_space<vmem>>, vector<1x8x128xf32>,
    } else {
    }
    return
  }
  func.func @transform_0(%arg0: i32, %arg1: i32) -> (i32, i32, i32) {
    %c1_i32 = arith.constant 1 : i32
    %0 = arith.muli %arg0, %c1_i32 : i32
    %1 = arith.addi %0, %arg1 : i32
    %c0_i32 = arith.constant 0 : i32
    %c0_i32_0 = arith.constant 0 : i32
    %c0_i32_1 = arith.constant 0 : i32
    return %1, %c0_i32, %c0_i32_0 : i32, i32, i32
  }
  func.func @transform_1(%arg0: i32, %arg1: i32) -> (i32, i32, i32) {
    %c1_i32 = arith.constant 1 : i32
    %0 = arith.muli %arg0, %c1_i32 : i32
    %1 = arith.addi %0, %arg1 : i32
    %c0_i32 = arith.constant 0 : i32
    %c0_i32_0 = arith.constant 0 : i32
    %c0_i32_1 = arith.constant 0 : i32
    return %1, %c0_i32, %c0_i32_0 : i32, i32, i32
  }
  func.func @transform_2(%arg0: i32, %arg1: i32) -> (i32, i32, i32) {
    %c0_i32 = arith.constant 0 : i32
    %c0_i32_0 = arith.constant 0 : i32
    %c0_i32_1 = arith.constant 0 : i32
    return %arg0, %c0_i32, %c0_i32_0 : i32, i32, i32
  }
}

</mosaic_0001>

<llo_original>
// kernel: tpu_custom_call.1
$region0: #{tpu_custom_call.1}
  #allocation0 [shape = 'u32[]', space=smem, size = 0x4, offset = 0x4, fixed_abs, tag = 'smem constant byte address 0x4 - core index']
  #allocation1 [shape = 'u32[144,128]{1,0:T(1,128)}', space=vmem, size = 0x12000, scoped, tag = 'internal scratch']
  #allocation2 [shape = 'f32[16,1,256]{2,1,0:T(1,128)}', space=vmem, size = 0x4000, scoped, tag = 'scratch operand']
  #allocation3 [shape = 'f32[16,4,256]{2,1,0:T(4,128)}', space=vmem, size = 0x10000, scoped, tag = 'scratch operand']
  #allocation4 [shape = 'f32[16,10,256]{2,1,0:T(8,128)}', space=vmem, size = 0x40000, scoped, tag = 'scratch operand']
  %s0 = inlined_call_operand.vmem [shape: f32[16,15,256], index: 0, kind: input, shape index: {}]
  %s1 = inlined_call_operand.vmem [shape: f32[16,15,256], index: 1, kind: input, shape index: {}]
  %s2 = inlined_call_operand.hbm [shape: f32[1,8,128], index: 2, kind: output, shape index: {}]
  %s3 = sld [smem:[#allocation0]]
  $region26: #{tpu_custom_call.1} parent=0
    _
  %s5 = ssub.s32 1, %s3
  %s6 = scalar_select 0, %s5, %s3
  $region1: #{tpu_custom_call.1} parent=0
    #allocation5 [shape = 'u8[4096]{0}', space=vmem, size = 0x1000, scoped, tag = 'output window, operand 0, single buffered']
    #allocation6 [shape = 's32[1]{0}', space=sflag, size = 0x4, scoped, tag = 'scoped memory for tpu_custom_call.1']
    %7 = vsyncpa [#allocation6], 0
    // Predicated region
    $region2: #{tpu_custom_call.1} parent=1 // pred_check
      _
    $region3: #{tpu_custom_call.1} parent=1 // pred_check_branch
      %9 = sbr.rel (0) target = $region5
    $region4: #{tpu_custom_call.1} parent=1 // pred_region
      %s10 = sadd.s32 0, 0
      %s11 = smul.u32 16, %s10
      %p12 = scmp.lt.s32.totalorder %s11, 15
      %s13 = scalar_select %p12, %s11, 15
      %s14 = smul.addr %s13, 4
      %s15 = smul.addr %s14, 8
      %s16 = scalar_lea.vmem %s0, %s15
      %s17 = sadd.s32 0, 0
      %s18 = smul.u32 16, %s17
    $region5: #{tpu_custom_call.1} parent=1 // pred_fallthru
      _
    // Predicated region
    $region6: #{tpu_custom_call.1} parent=1 // pred_check
      _
    $region7: #{tpu_custom_call.1} parent=1 // pred_check_branch
      %20 = sbr.rel (0) target = $region9
    $region8: #{tpu_custom_call.1} parent=1 // pred_region
      %s21 = sadd.s32 0, 0
      %s22 = smul.u32 16, %s21
      %p23 = scmp.lt.s32.totalorder %s22, 15
      %s24 = scalar_select %p23, %s22, 15
      %s25 = smul.addr %s24, 4
      %s26 = smul.addr %s25, 8
      %s27 = scalar_lea.vmem %s1, %s26
      %s28 = sadd.s32 0, 0
      %s29 = smul.u32 16, %s28
    $region9: #{tpu_custom_call.1} parent=1 // pred_fallthru
      _
    %s30 = sadd.s32 0, 0
    %s31 = smul.u32 16, %s30
    %p32 = scmp.lt.s32.totalorder %s31, 15
    %s33 = scalar_select %p32, %s31, 15
    %s34 = smul.addr %s33, 4
    %s35 = smul.addr %s34, 8
    %s36 = scalar_lea.vmem %s0, %s35
    %s37 = sadd.s32 0, 0
    %s38 = smul.u32 16, %s37
    %p39 = scmp.lt.s32.totalorder %s38, 15
    %s40 = scalar_select %p39, %s38, 15
    %s41 = smul.addr %s40, 4
    %s42 = smul.addr %s41, 8
    %s43 = scalar_lea.vmem %s1, %s42
    %s44 = sadd.s32 0, 0
    %s45 = smul.u32 16, %s44
    %p46 = scmp.lt.s32.totalorder %s45, 15
    %s47 = scalar_select %p46, %s45, 15
    %s48 = smul.addr %s47, 4
    %s49 = smul.addr %s48, 8
    %s50 = scalar_lea.vmem %s0, %s49
    %s51 = sadd.s32 0, 0
    %s52 = smul.u32 16, %s51
    %s53 = sadd.s32 0, 0
    %s54 = smul.u32 16, %s53
    %p55 = scmp.lt.s32.totalorder %s54, 15
    %s56 = scalar_select %p55, %s54, 15
    %s57 = smul.addr %s56, 4
    %s58 = smul.addr %s57, 8
    %s59 = scalar_lea.vmem %s1, %s58
    %s60 = sadd.s32 0, 0
    %s61 = smul.u32 16, %s60
    %p62 = scmp.eq.s32.totalorder 0, 0
    // Predicated region
    $region10: #{tpu_custom_call.1} parent=1 // pred_check
      %p63 = pneg %p62
    $region11: #{tpu_custom_call.1} parent=1 // pred_check_branch
      %65 = sbr.rel (%p63) target = $region13
    $region12: #{tpu_custom_call.1} parent=1 // pred_region
      %v66 = vlaneseq
      %vm67 = vcmp.ge.s32.totalorder %v66, 0
      %vm68 = vcmp.lt.s32.totalorder %v66, 256
      %vm69 = vmand %vm67, %vm68
      %70 = vst.msk [vmem:[#allocation2] sm:$0x3] %vm69, 0.0
      %71 = vst.msk [vmem:[#allocation2 + $0x2] sm:$0x3] %vm69, 0.0
      %72 = vst.msk [vmem:[#allocation2 + $0x4] sm:$0x3] %vm69, 0.0
      %73 = vst.msk [vmem:[#allocation2 + $0x6] sm:$0x3] %vm69, 0.0
      %74 = vst.msk [vmem:[#allocation2 + $0x8] sm:$0x3] %vm69, 0.0
      %75 = vst.msk [vmem:[#allocation2 + $0xa] sm:$0x3] %vm69, 0.0
      %76 = vst.msk [vmem:[#allocation2 + $0xc] sm:$0x3] %vm69, 0.0
      %77 = vst.msk [vmem:[#allocation2 + $0xe] sm:$0x3] %vm69, 0.0
      %78 = vst.msk [vmem:[#allocation2 + $0x10] sm:$0x3] %vm69, 0.0
      %79 = vst.msk [vmem:[#allocation2 + $0x12] sm:$0x3] %vm69, 0.0
      %80 = vst.msk [vmem:[#allocation2 + $0x14] sm:$0x3] %vm69, 0.0
      %81 = vst.msk [vmem:[#allocation2 + $0x16] sm:$0x3] %vm69, 0.0
      %82 = vst.msk [vmem:[#allocation2 + $0x18] sm:$0x3] %vm69, 0.0
      %83 = vst.msk [vmem:[#allocation2 + $0x1a] sm:$0x3] %vm69, 0.0
      %84 = vst.msk [vmem:[#allocation2 + $0x1c] sm:$0x3] %vm69, 0.0
      %85 = vst.msk [vmem:[#allocation2 + $0x1e] sm:$0x3] %vm69, 0.0
      %86 = vst [vmem:[#allocation3] sm:$0xff] 0.0
      %87 = vst [vmem:[#allocation3 + $0x8] sm:$0xff] 0.0
      %88 = vst [vmem:[#allocation3 + $0x10] sm:$0xff] 0.0
      %89 = vst [vmem:[#allocation3 + $0x18] sm:$0xff] 0.0
      %90 = vst [vmem:[#allocation3 + $0x20] sm:$0xff] 0.0
      %91 = vst [vmem:[#allocation3 + $0x28] sm:$0xff] 0.0
      %92 = vst [vmem:[#allocation3 + $0x30] sm:$0xff] 0.0
      %93 = vst [vmem:[#allocation3 + $0x38] sm:$0xff] 0.0
      %94 = vst [vmem:[#allocation3 + $0x40] sm:$0xff] 0.0
      %95 = vst [vmem:[#allocation3 + $0x48] sm:$0xff] 0.0
      %96 = vst [vmem:[#allocation3 + $0x50] sm:$0xff] 0.0
      %97 = vst [vmem:[#allocation3 + $0x58] sm:$0xff] 0.0
      %98 = vst [vmem:[#allocation3 + $0x60] sm:$0xff] 0.0
      %99 = vst [vmem:[#allocation3 + $0x68] sm:$0xff] 0.0
      %100 = vst [vmem:[#allocation3 + $0x70] sm:$0xff] 0.0
      %101 = vst [vmem:[#allocation3 + $0x78] sm:$0xff] 0.0
      %102 = vst [vmem:[#allocation4] sm:$0xff] 0.0
      %103 = vst [vmem:[#allocation4 + $0x8] sm:$0xff] 0.0
      %104 = vst [vmem:[#allocation4 + $0x10] sm:$0x3] 0.0
      %105 = vst [vmem:[#allocation4 + $0x18] sm:$0x3] 0.0
      %106 = vst [vmem:[#allocation4 + $0x20] sm:$0xff] 0.0
      %107 = vst [vmem:[#allocation4 + $0x28] sm:$0xff] 0.0
      %108 = vst [vmem:[#allocation4 + $0x30] sm:$0x3] 0.0
      %109 = vst [vmem:[#allocation4 + $0x38] sm:$0x3] 0.0
      %110 = vst [vmem:[#allocation4 + $0x40] sm:$0xff] 0.0
      %111 = vst [vmem:[#allocation4 + $0x48] sm:$0xff] 0.0
      %112 = vst [vmem:[#allocation4 + $0x50] sm:$0x3] 0.0
      %113 = vst [vmem:[#allocation4 + $0x58] sm:$0x3] 0.0
      %114 = vst [vmem:[#allocation4 + $0x60] sm:$0xff] 0.0
      %115 = vst [vmem:[#allocation4 + $0x68] sm:$0xff] 0.0
      %116 = vst [vmem:[#allocation4 + $0x70] sm:$0x3] 0.0
      %117 = vst [vmem:[#allocation4 + $0x78] sm:$0x3] 0.0
      %118 = vst [vmem:[#allocation4 + $0x80] sm:$0xff] 0.0
      %119 = vst [vmem:[#allocation4 + $0x88] sm:$0xff] 0.0
      %120 = vst [vmem:[#allocation4 + $0x90] sm:$0x3] 0.0
      %121 = vst [vmem:[#allocation4 + $0x98] sm:$0x3] 0.0
      %122 = vst [vmem:[#allocation4 + $0xa0] sm:$0xff] 0.0
      %123 = vst [vmem:[#allocation4 + $0xa8] sm:$0xff] 0.0
      %124 = vst [vmem:[#allocation4 + $0xb0] sm:$0x3] 0.0
      %125 = vst [vmem:[#allocation4 + $0xb8] sm:$0x3] 0.0
      %126 = vst [vmem:[#allocation4 + $0xc0] sm:$0xff] 0.0
      %127 = vst [vmem:[#allocation4 + $0xc8] sm:$0xff] 0.0
      %128 = vst [vmem:[#allocation4 + $0xd0] sm:$0x3] 0.0
      %129 = vst [vmem:[#allocation4 + $0xd8] sm:$0x3] 0.0
      %130 = vst [vmem:[#allocation4 + $0xe0] sm:$0xff] 0.0
      %131 = vst [vmem:[#allocation4 + $0xe8] sm:$0xff] 0.0
      %132 = vst [vmem:[#allocation4 + $0xf0] sm:$0x3] 0.0
      %133 = vst [vmem:[#allocation4 + $0xf8] sm:$0x3] 0.0
      %134 = vst [vmem:[#allocation4 + $0x100] sm:$0xff] 0.0
      %135 = vst [vmem:[#allocation4 + $0x108] sm:$0xff] 0.0
      %136 = vst [vmem:[#allocation4 + $0x110] sm:$0x3] 0.0
      %137 = vst [vmem:[#allocation4 + $0x118] sm:$0x3] 0.0
      %138 = vst [vmem:[#allocation4 + $0x120] sm:$0xff] 0.0
      %139 = vst [vmem:[#allocation4 + $0x128] sm:$0xff] 0.0
      %140 = vst [vmem:[#allocation4 + $0x130] sm:$0x3] 0.0
      %141 = vst [vmem:[#allocation4 + $0x138] sm:$0x3] 0.0
      %142 = vst [vmem:[#allocation4 + $0x140] sm:$0xff] 0.0
      %143 = vst [vmem:[#allocation4 + $0x148] sm:$0xff] 0.0
      %144 = vst [vmem:[#allocation4 + $0x150] sm:$0x3] 0.0
      %145 = vst [vmem:[#allocation4 + $0x158] sm:$0x3] 0.0
      %146 = vst [vmem:[#allocation4 + $0x160] sm:$0xff] 0.0
      %147 = vst [vmem:[#allocation4 + $0x168] sm:$0xff] 0.0
      %148 = vst [vmem:[#allocation4 + $0x170] sm:$0x3] 0.0
      %149 = vst [vmem:[#allocation4 + $0x178] sm:$0x3] 0.0
      %150 = vst [vmem:[#allocation4 + $0x180] sm:$0xff] 0.0
      %151 = vst [vmem:[#allocation4 + $0x188] sm:$0xff] 0.0
      %152 = vst [vmem:[#allocation4 + $0x190] sm:$0x3] 0.0
      %153 = vst [vmem:[#allocation4 + $0x198] sm:$0x3] 0.0
      %154 = vst [vmem:[#allocation4 + $0x1a0] sm:$0xff] 0.0
      %155 = vst [vmem:[#allocation4 + $0x1a8] sm:$0xff] 0.0
      %156 = vst [vmem:[#allocation4 + $0x1b0] sm:$0x3] 0.0
      %157 = vst [vmem:[#allocation4 + $0x1b8] sm:$0x3] 0.0
      %158 = vst [vmem:[#allocation4 + $0x1c0] sm:$0xff] 0.0
      %159 = vst [vmem:[#allocation4 + $0x1c8] sm:$0xff] 0.0
      %160 = vst [vmem:[#allocation4 + $0x1d0] sm:$0x3] 0.0
      %161 = vst [vmem:[#allocation4 + $0x1d8] sm:$0x3] 0.0
      %162 = vst [vmem:[#allocation4 + $0x1e0] sm:$0xff] 0.0
      %163 = vst [vmem:[#allocation4 + $0x1e8] sm:$0xff] 0.0
      %164 = vst [vmem:[#allocation4 + $0x1f0] sm:$0x3] 0.0
      %165 = vst [vmem:[#allocation4 + $0x1f8] sm:$0x3] 0.0
    $region13: #{tpu_custom_call.1} parent=1 // pred_fallthru
      _
    %v166 = vld [vmem:[%s50] sm:$0xff]
    %v167 = vld [vmem:[%s50 + $0x8] sm:$0xff]
    %v168 = vld [vmem:[%s50 + $0x10] sm:$0x7f]
    %v169 = vld [vmem:[%s50 + $0x18] sm:$0x7f]
    %v170 = vld [vmem:[%s50 + $0x20] sm:$0xff]
    %v171 = vld [vmem:[%s50 + $0x28] sm:$0xff]
    %v172 = vld [vmem:[%s50 + $0x30] sm:$0x7f]
    %v173 = vld [vmem:[%s50 + $0x38] sm:$0x7f]
    %v174 = vld [vmem:[%s50 + $0x40] sm:$0xff]
    %v175 = vld [vmem:[%s50 + $0x48] sm:$0xff]
    %v176 = vld [vmem:[%s50 + $0x50] sm:$0x7f]
    %v177 = vld [vmem:[%s50 + $0x58] sm:$0x7f]
    %v178 = vld [vmem:[%s50 + $0x60] sm:$0xff]
    %v179 = vld [vmem:[%s50 + $0x68] sm:$0xff]
    %v180 = vld [vmem:[%s50 + $0x70] sm:$0x7f]
    %v181 = vld [vmem:[%s50 + $0x78] sm:$0x7f]
    %v182 = vld [vmem:[%s50 + $0x80] sm:$0xff]
    %v183 = vld [vmem:[%s50 + $0x88] sm:$0xff]
    %v184 = vld [vmem:[%s50 + $0x90] sm:$0x7f]
    %v185 = vld [vmem:[%s50 + $0x98] sm:$0x7f]
    %v186 = vld [vmem:[%s50 + $0xa0] sm:$0xff]
    %v187 = vld [vmem:[%s50 + $0xa8] sm:$0xff]
    %v188 = vld [vmem:[%s50 + $0xb0] sm:$0x7f]
    %v189 = vld [vmem:[%s50 + $0xb8] sm:$0x7f]
    %v190 = vld [vmem:[%s50 + $0xc0] sm:$0xff]
    %v191 = vld [vmem:[%s50 + $0xc8] sm:$0xff]
    %v192 = vld [vmem:[%s50 + $0xd0] sm:$0x7f]
    %v193 = vld [vmem:[%s50 + $0xd8] sm:$0x7f]
    %v194 = vld [vmem:[%s50 + $0xe0] sm:$0xff]
    %v195 = vld [vmem:[%s50 + $0xe8] sm:$0xff]
    %v196 = vld [vmem:[%s50 + $0xf0] sm:$0x7f]
    %v197 = vld [vmem:[%s50 + $0xf8] sm:$0x7f]
    %v198 = vld [vmem:[%s50 + $0x100] sm:$0xff]
    %v199 = vld [vmem:[%s50 + $0x108] sm:$0xff]
    %v200 = vld [vmem:[%s50 + $0x110] sm:$0x7f]
    %v201 = vld [vmem:[%s50 + $0x118] sm:$0x7f]
    %v202 = vld [vmem:[%s50 + $0x120] sm:$0xff]
    %v203 = vld [vmem:[%s50 + $0x128] sm:$0xff]
    %v204 = vld [vmem:[%s50 + $0x130] sm:$0x7f]
    %v205 = vld [vmem:[%s50 + $0x138] sm:$0x7f]
    %v206 = vld [vmem:[%s50 + $0x140] sm:$0xff]
    %v207 = vld [vmem:[%s50 + $0x148] sm:$0xff]
    %v208 = vld [vmem:[%s50 + $0x150] sm:$0x7f]
    %v209 = vld [vmem:[%s50 + $0x158] sm:$0x7f]
    %v210 = vld [vmem:[%s50 + $0x160] sm:$0xff]
    %v211 = vld [vmem:[%s50 + $0x168] sm:$0xff]
    %v212 = vld [vmem:[%s50 + $0x170] sm:$0x7f]
    %v213 = vld [vmem:[%s50 + $0x178] sm:$0x7f]
    %v214 = vld [vmem:[%s50 + $0x180] sm:$0xff]
    %v215 = vld [vmem:[%s50 + $0x188] sm:$0xff]
    %v216 = vld [vmem:[%s50 + $0x190] sm:$0x7f]
    %v217 = vld [vmem:[%s50 + $0x198] sm:$0x7f]
    %v218 = vld [vmem:[%s50 + $0x1a0] sm:$0xff]
    %v219 = vld [vmem:[%s50 + $0x1a8] sm:$0xff]
    %v220 = vld [vmem:[%s50 + $0x1b0] sm:$0x7f]
    %v221 = vld [vmem:[%s50 + $0x1b8] sm:$0x7f]
    %v222 = vld [vmem:[%s50 + $0x1c0] sm:$0xff]
    %v223 = vld [vmem:[%s50 + $0x1c8] sm:$0xff]
    %v224 = vld [vmem:[%s50 + $0x1d0] sm:$0x7f]
    %v225 = vld [vmem:[%s50 + $0x1d8] sm:$0x7f]
    %v226 = vld [vmem:[%s50 + $0x1e0] sm:$0xff]
    %v227 = vld [vmem:[%s50 + $0x1e8] sm:$0xff]
    %v228 = vld [vmem:[%s50 + $0x1f0] sm:$0x7f]
    %v229 = vld [vmem:[%s50 + $0x1f8] sm:$0x7f]
    %v230 = vld [vmem:[%s59] sm:$0xff]
    %v231 = vld [vmem:[%s59 + $0x8] sm:$0xff]
    %v232 = vld [vmem:[%s59 + $0x10] sm:$0x7f]
    %v233 = vld [vmem:[%s59 + $0x18] sm:$0x7f]
    %v234 = vld [vmem:[%s59 + $0x20] sm:$0xff]
    %v235 = vld [vmem:[%s59 + $0x28] sm:$0xff]
    %v236 = vld [vmem:[%s59 + $0x30] sm:$0x7f]
    %v237 = vld [vmem:[%s59 + $0x38] sm:$0x7f]
    %v238 = vld [vmem:[%s59 + $0x40] sm:$0xff]
    %v239 = vld [vmem:[%s59 + $0x48] sm:$0xff]
    %v240 = vld [vmem:[%s59 + $0x50] sm:$0x7f]
    %v241 = vld [vmem:[%s59 + $0x58] sm:$0x7f]
    %v242 = vld [vmem:[%s59 + $0x60] sm:$0xff]
    %v243 = vld [vmem:[%s59 + $0x68] sm:$0xff]
    %v244 = vld [vmem:[%s59 + $0x70] sm:$0x7f]
    %v245 = vld [vmem:[%s59 + $0x78] sm:$0x7f]
    %v246 = vld [vmem:[%s59 + $0x80] sm:$0xff]
    %v247 = vld [vmem:[%s59 + $0x88] sm:$0xff]
    %v248 = vld [vmem:[%s59 + $0x90] sm:$0x7f]
    %v249 = vld [vmem:[%s59 + $0x98] sm:$0x7f]
    %v250 = vld [vmem:[%s59 + $0xa0] sm:$0xff]
    %v251 = vld [vmem:[%s59 + $0xa8] sm:$0xff]
    %v252 = vld [vmem:[%s59 + $0xb0] sm:$0x7f]
    %v253 = vld [vmem:[%s59 + $0xb8] sm:$0x7f]
    %v254 = vld [vmem:[%s59 + $0xc0] sm:$0xff]
    %v255 = vld [vmem:[%s59 + $0xc8] sm:$0xff]
    %v256 = vld [vmem:[%s59 + $0xd0] sm:$0x7f]
    %v257 = vld [vmem:[%s59 + $0xd8] sm:$0x7f]
    %v258 = vld [vmem:[%s59 + $0xe0] sm:$0xff]
    %v259 = vld [vmem:[%s59 + $0xe8] sm:$0xff]
    %v260 = vld [vmem:[%s59 + $0xf0] sm:$0x7f]
    %v261 = vld [vmem:[%s59 + $0xf8] sm:$0x7f]
    %v262 = vld [vmem:[%s59 + $0x100] sm:$0xff]
    %v263 = vld [vmem:[%s59 + $0x108] sm:$0xff]
    %v264 = vld [vmem:[%s59 + $0x110] sm:$0x7f]
    %v265 = vld [vmem:[%s59 + $0x118] sm:$0x7f]
    %v266 = vld [vmem:[%s59 + $0x120] sm:$0xff]
    %v267 = vld [vmem:[%s59 + $0x128] sm:$0xff]
    %v268 = vld [vmem:[%s59 + $0x130] sm:$0x7f]
    %v269 = vld [vmem:[%s59 + $0x138] sm:$0x7f]
    %v270 = vld [vmem:[%s59 + $0x140] sm:$0xff]
    %v271 = vld [vmem:[%s59 + $0x148] sm:$0xff]
    %v272 = vld [vmem:[%s59 + $0x150] sm:$0x7f]
    %v273 = vld [vmem:[%s59 + $0x158] sm:$0x7f]
    %v274 = vld [vmem:[%s59 + $0x160] sm:$0xff]
    %v275 = vld [vmem:[%s59 + $0x168] sm:$0xff]
    %v276 = vld [vmem:[%s59 + $0x170] sm:$0x7f]
    %v277 = vld [vmem:[%s59 + $0x178] sm:$0x7f]
    %v278 = vld [vmem:[%s59 + $0x180] sm:$0xff]
    %v279 = vld [vmem:[%s59 + $0x188] sm:$0xff]
    %v280 = vld [vmem:[%s59 + $0x190] sm:$0x7f]
    %v281 = vld [vmem:[%s59 + $0x198] sm:$0x7f]
    %v282 = vld [vmem:[%s59 + $0x1a0] sm:$0xff]
    %v283 = vld [vmem:[%s59 + $0x1a8] sm:$0xff]
    %v284 = vld [vmem:[%s59 + $0x1b0] sm:$0x7f]
    %v285 = vld [vmem:[%s59 + $0x1b8] sm:$0x7f]
    %v286 = vld [vmem:[%s59 + $0x1c0] sm:$0xff]
    %v287 = vld [vmem:[%s59 + $0x1c8] sm:$0xff]
    %v288 = vld [vmem:[%s59 + $0x1d0] sm:$0x7f]
    %v289 = vld [vmem:[%s59 + $0x1d8] sm:$0x7f]
    %v290 = vld [vmem:[%s59 + $0x1e0] sm:$0xff]
    %v291 = vld [vmem:[%s59 + $0x1e8] sm:$0xff]
    %v292 = vld [vmem:[%s59 + $0x1f0] sm:$0x7f]
    %v293 = vld [vmem:[%s59 + $0x1f8] sm:$0x7f]
    %s294 = sadd.s32 0, 0
    %s295 = smul.u32 %s294, 16
    %v296 = vsub.f32 %v166, %v230
    %v297 = vsub.f32 %v167, %v231
    %v298 = vsub.f32 %v170, %v234
    %v299 = vsub.f32 %v171, %v235
    %v300 = vsub.f32 %v174, %v238
    %v301 = vsub.f32 %v175, %v239
    %v302 = vsub.f32 %v178, %v242
    %v303 = vsub.f32 %v179, %v243
    %v304 = vsub.f32 %v182, %v246
    %v305 = vsub.f32 %v183, %v247
    %v306 = vsub.f32 %v186, %v250
    %v307 = vsub.f32 %v187, %v251
    %v308 = vsub.f32 %v190, %v254
    %v309 = vsub.f32 %v191, %v255
    %v310 = vsub.f32 %v194, %v258
    %v311 = vsub.f32 %v195, %v259
    %v312 = vsub.f32 %v198, %v262
    %v313 = vsub.f32 %v199, %v263
    %v314 = vsub.f32 %v202, %v266
    %v315 = vsub.f32 %v203, %v267
    %v316 = vsub.f32 %v206, %v270
    %v317 = vsub.f32 %v207, %v271
    %v318 = vsub.f32 %v210, %v274
    %v319 = vsub.f32 %v211, %v275
    %v320 = vsub.f32 %v214, %v278
    %v321 = vsub.f32 %v215, %v279
    %v322 = vsub.f32 %v218, %v282
    %v323 = vsub.f32 %v219, %v283
    %v324 = vsub.f32 %v222, %v286
    %v325 = vsub.f32 %v223, %v287
    %v326 = vsub.f32 %v226, %v290
    %v327 = vsub.f32 %v227, %v291
    %vm328 = vcmp.gt.f32.partialorder %v230, 0.0
    %vm329 = vcmp.gt.f32.partialorder %v231, 0.0
    %vm330 = vcmp.gt.f32.partialorder %v234, 0.0
    %vm331 = vcmp.gt.f32.partialorder %v235, 0.0
    %vm332 = vcmp.gt.f32.partialorder %v238, 0.0
    %vm333 = vcmp.gt.f32.partialorder %v239, 0.0
    %vm334 = vcmp.gt.f32.partialorder %v242, 0.0
    %vm335 = vcmp.gt.f32.partialorder %v243, 0.0
    %vm336 = vcmp.gt.f32.partialorder %v246, 0.0
    %vm337 = vcmp.gt.f32.partialorder %v247, 0.0
    %vm338 = vcmp.gt.f32.partialorder %v250, 0.0
    %vm339 = vcmp.gt.f32.partialorder %v251, 0.0
    %vm340 = vcmp.gt.f32.partialorder %v254, 0.0
    %vm341 = vcmp.gt.f32.partialorder %v255, 0.0
    %vm342 = vcmp.gt.f32.partialorder %v258, 0.0
    %vm343 = vcmp.gt.f32.partialorder %v259, 0.0
    %vm344 = vcmp.gt.f32.partialorder %v262, 0.0
    %vm345 = vcmp.gt.f32.partialorder %v263, 0.0
    %vm346 = vcmp.gt.f32.partialorder %v266, 0.0
    %vm347 = vcmp.gt.f32.partialorder %v267, 0.0
    %vm348 = vcmp.gt.f32.partialorder %v270, 0.0
    %vm349 = vcmp.gt.f32.partialorder %v271, 0.0
    %vm350 = vcmp.gt.f32.partialorder %v274, 0.0
    %vm351 = vcmp.gt.f32.partialorder %v275, 0.0
    %vm352 = vcmp.gt.f32.partialorder %v278, 0.0
    %vm353 = vcmp.gt.f32.partialorder %v279, 0.0
    %vm354 = vcmp.gt.f32.partialorder %v282, 0.0
    %vm355 = vcmp.gt.f32.partialorder %v283, 0.0
    %vm356 = vcmp.gt.f32.partialorder %v286, 0.0
    %vm357 = vcmp.gt.f32.partialorder %v287, 0.0
    %vm358 = vcmp.gt.f32.partialorder %v290, 0.0
    %vm359 = vcmp.gt.f32.partialorder %v291, 0.0
    %v360 = vmul.f32 %v296, %v296
    %v361 = vmul.f32 %v297, %v297
    %v362 = vmul.f32 %v298, %v298
    %v363 = vmul.f32 %v299, %v299
    %v364 = vmul.f32 %v300, %v300
    %v365 = vmul.f32 %v301, %v301
    %v366 = vmul.f32 %v302, %v302
    %v367 = vmul.f32 %v303, %v303
    %v368 = vmul.f32 %v304, %v304
    %v369 = vmul.f32 %v305, %v305
    %v370 = vmul.f32 %v306, %v306
    %v371 = vmul.f32 %v307, %v307
    %v372 = vmul.f32 %v308, %v308
    %v373 = vmul.f32 %v309, %v309
    %v374 = vmul.f32 %v310, %v310
    %v375 = vmul.f32 %v311, %v311
    %v376 = vmul.f32 %v312, %v312
    %v377 = vmul.f32 %v313, %v313
    %v378 = vmul.f32 %v314, %v314
    %v379 = vmul.f32 %v315, %v315
    %v380 = vmul.f32 %v316, %v316
    %v381 = vmul.f32 %v317, %v317
    %v382 = vmul.f32 %v318, %v318
    %v383 = vmul.f32 %v319, %v319
    %v384 = vmul.f32 %v320, %v320
    %v385 = vmul.f32 %v321, %v321
    %v386 = vmul.f32 %v322, %v322
    %v387 = vmul.f32 %v323, %v323
    %v388 = vmul.f32 %v324, %v324
    %v389 = vmul.f32 %v325, %v325
    %v390 = vmul.f32 %v326, %v326
    %v391 = vmul.f32 %v327, %v327
    %vm392 = vcmp.eq.f32.partialorder %v230, 0.0
    %vm393 = vcmp.eq.f32.partialorder %v231, 0.0
    %vm394 = vcmp.eq.f32.partialorder %v234, 0.0
    %vm395 = vcmp.eq.f32.partialorder %v235, 0.0
    %vm396 = vcmp.eq.f32.partialorder %v238, 0.0
    %vm397 = vcmp.eq.f32.partialorder %v239, 0.0
    %vm398 = vcmp.eq.f32.partialorder %v242, 0.0
    %vm399 = vcmp.eq.f32.partialorder %v243, 0.0
    %vm400 = vcmp.eq.f32.partialorder %v246, 0.0
    %vm401 = vcmp.eq.f32.partialorder %v247, 0.0
    %vm402 = vcmp.eq.f32.partialorder %v250, 0.0
    %vm403 = vcmp.eq.f32.partialorder %v251, 0.0
    %vm404 = vcmp.eq.f32.partialorder %v254, 0.0
    %vm405 = vcmp.eq.f32.partialorder %v255, 0.0
    %vm406 = vcmp.eq.f32.partialorder %v258, 0.0
    %vm407 = vcmp.eq.f32.partialorder %v259, 0.0
    %vm408 = vcmp.eq.f32.partialorder %v262, 0.0
    %vm409 = vcmp.eq.f32.partialorder %v263, 0.0
    %vm410 = vcmp.eq.f32.partialorder %v266, 0.0
    %vm411 = vcmp.eq.f32.partialorder %v267, 0.0
    %vm412 = vcmp.eq.f32.partialorder %v270, 0.0
    %vm413 = vcmp.eq.f32.partialorder %v271, 0.0
    %vm414 = vcmp.eq.f32.partialorder %v274, 0.0
    %vm415 = vcmp.eq.f32.partialorder %v275, 0.0
    %vm416 = vcmp.eq.f32.partialorder %v278, 0.0
    %vm417 = vcmp.eq.f32.partialorder %v279, 0.0
    %vm418 = vcmp.eq.f32.partialorder %v282, 0.0
    %vm419 = vcmp.eq.f32.partialorder %v283, 0.0
    %vm420 = vcmp.eq.f32.partialorder %v286, 0.0
    %vm421 = vcmp.eq.f32.partialorder %v287, 0.0
    %vm422 = vcmp.eq.f32.partialorder %v290, 0.0
    %vm423 = vcmp.eq.f32.partialorder %v291, 0.0
    %v424 = vmul.f32 %v166, %v166
    %v425 = vmul.f32 %v167, %v167
    %v426 = vmul.f32 %v170, %v170
    %v427 = vmul.f32 %v171, %v171
    %v428 = vmul.f32 %v174, %v174
    %v429 = vmul.f32 %v175, %v175
    %v430 = vmul.f32 %v178, %v178
    %v431 = vmul.f32 %v179, %v179
    %v432 = vmul.f32 %v182, %v182
    %v433 = vmul.f32 %v183, %v183
    %v434 = vmul.f32 %v186, %v186
    %v435 = vmul.f32 %v187, %v187
    %v436 = vmul.f32 %v190, %v190
    %v437 = vmul.f32 %v191, %v191
    %v438 = vmul.f32 %v194, %v194
    %v439 = vmul.f32 %v195, %v195
    %v440 = vmul.f32 %v198, %v198
    %v441 = vmul.f32 %v199, %v199
    %v442 = vmul.f32 %v202, %v202
    %v443 = vmul.f32 %v203, %v203
    %v444 = vmul.f32 %v206, %v206
    %v445 = vmul.f32 %v207, %v207
    %v446 = vmul.f32 %v210, %v210
    %v447 = vmul.f32 %v211, %v211
    %v448 = vmul.f32 %v214, %v214
    %v449 = vmul.f32 %v215, %v215
    %v450 = vmul.f32 %v218, %v218
    %v451 = vmul.f32 %v219, %v219
    %v452 = vmul.f32 %v222, %v222
    %v453 = vmul.f32 %v223, %v223
    %v454 = vmul.f32 %v226, %v226
    %v455 = vmul.f32 %v227, %v227
    %v456 = vmul.f32 %v424, 0.5
    %v457 = vmul.f32 %v425, 0.5
    %v458 = vmul.f32 %v426, 0.5
    %v459 = vmul.f32 %v427, 0.5
    %v460 = vmul.f32 %v428, 0.5
    %v461 = vmul.f32 %v429, 0.5
    %v462 = vmul.f32 %v430, 0.5
    %v463 = vmul.f32 %v431, 0.5
    %v464 = vmul.f32 %v432, 0.5
    %v465 = vmul.f32 %v433, 0.5
    %v466 = vmul.f32 %v434, 0.5
    %v467 = vmul.f32 %v435, 0.5
    %v468 = vmul.f32 %v436, 0.5
    %v469 = vmul.f32 %v437, 0.5
    %v470 = vmul.f32 %v438, 0.5
    %v471 = vmul.f32 %v439, 0.5
    %v472 = vmul.f32 %v440, 0.5
    %v473 = vmul.f32 %v441, 0.5
    %v474 = vmul.f32 %v442, 0.5
    %v475 = vmul.f32 %v443, 0.5
    %v476 = vmul.f32 %v444, 0.5
    %v477 = vmul.f32 %v445, 0.5
    %v478 = vmul.f32 %v446, 0.5
    %v479 = vmul.f32 %v447, 0.5
    %v480 = vmul.f32 %v448, 0.5
    %v481 = vmul.f32 %v449, 0.5
    %v482 = vmul.f32 %v450, 0.5
    %v483 = vmul.f32 %v451, 0.5
    %v484 = vmul.f32 %v452, 0.5
    %v485 = vmul.f32 %v453, 0.5
    %v486 = vmul.f32 %v454, 0.5
    %v487 = vmul.f32 %v455, 0.5
    %v488 = vsel %vm392, %v456, 0.0
    %v489 = vsel %vm393, %v457, 0.0
    %v490 = vsel %vm394, %v458, 0.0
    %v491 = vsel %vm395, %v459, 0.0
    %v492 = vsel %vm396, %v460, 0.0
    %v493 = vsel %vm397, %v461, 0.0
    %v494 = vsel %vm398, %v462, 0.0
    %v495 = vsel %vm399, %v463, 0.0
    %v496 = vsel %vm400, %v464, 0.0
    %v497 = vsel %vm401, %v465, 0.0
    %v498 = vsel %vm402, %v466, 0.0
    %v499 = vsel %vm403, %v467, 0.0
    %v500 = vsel %vm404, %v468, 0.0
    %v501 = vsel %vm405, %v469, 0.0
    %v502 = vsel %vm406, %v470, 0.0
    %v503 = vsel %vm407, %v471, 0.0
    %v504 = vsel %vm408, %v472, 0.0
    %v505 = vsel %vm409, %v473, 0.0
    %v506 = vsel %vm410, %v474, 0.0
    %v507 = vsel %vm411, %v475, 0.0
    %v508 = vsel %vm412, %v476, 0.0
    %v509 = vsel %vm413, %v477, 0.0
    %v510 = vsel %vm414, %v478, 0.0
    %v511 = vsel %vm415, %v479, 0.0
    %v512 = vsel %vm416, %v480, 0.0
    %v513 = vsel %vm417, %v481, 0.0
    %v514 = vsel %vm418, %v482, 0.0
    %v515 = vsel %vm419, %v483, 0.0
    %v516 = vsel %vm420, %v484, 0.0
    %v517 = vsel %vm421, %v485, 0.0
    %v518 = vsel %vm422, %v486, 0.0
    %v519 = vsel %vm423, %v487, 0.0
    %v520 = vsel %vm328, %v360, %v488
    %v521 = vsel %vm329, %v361, %v489
    %v522 = vsel %vm330, %v362, %v490
    %v523 = vsel %vm331, %v363, %v491
    %v524 = vsel %vm332, %v364, %v492
    %v525 = vsel %vm333, %v365, %v493
    %v526 = vsel %vm334, %v366, %v494
    %v527 = vsel %vm335, %v367, %v495
    %v528 = vsel %vm336, %v368, %v496
    %v529 = vsel %vm337, %v369, %v497
    %v530 = vsel %vm338, %v370, %v498
    %v531 = vsel %vm339, %v371, %v499
    %v532 = vsel %vm340, %v372, %v500
    %v533 = vsel %vm341, %v373, %v501
    %v534 = vsel %vm342, %v374, %v502
    %v535 = vsel %vm343, %v375, %v503
    %v536 = vsel %vm344, %v376, %v504
    %v537 = vsel %vm345, %v377, %v505
    %v538 = vsel %vm346, %v378, %v506
    %v539 = vsel %vm347, %v379, %v507
    %v540 = vsel %vm348, %v380, %v508
    %v541 = vsel %vm349, %v381, %v509
    %v542 = vsel %vm350, %v382, %v510
    %v543 = vsel %vm351, %v383, %v511
    %v544 = vsel %vm352, %v384, %v512
    %v545 = vsel %vm353, %v385, %v513
    %v546 = vsel %vm354, %v386, %v514
    %v547 = vsel %vm355, %v387, %v515
    %v548 = vsel %vm356, %v388, %v516
    %v549 = vsel %vm357, %v389, %v517
    %v550 = vsel %vm358, %v390, %v518
    %v551 = vsel %vm359, %v391, %v519
    %v552 = vrsqrt.pop %v166
    %v553 = vmul.f32 %v166, %v552
    %vm554 = vcmp.eq.f32.partialorder %v166, inf
    %v555 = vsel %vm554, %v166, %v553
    %vm556 = vcmp.eq.f32.partialorder %v166, 0.0
    %v557 = vand.u32 %v166, 2147483648
    %v558 = vsel %vm556, %v557, %v555
    %v559 = vrsqrt.pop %v167
    %v560 = vmul.f32 %v167, %v559
    %vm561 = vcmp.eq.f32.partialorder %v167, inf
    %v562 = vsel %vm561, %v167, %v560
    %vm563 = vcmp.eq.f32.partialorder %v167, 0.0
    %v564 = vand.u32 %v167, 2147483648
    %v565 = vsel %vm563, %v564, %v562
    %v566 = vrsqrt.pop %v170
    %v567 = vmul.f32 %v170, %v566
    %vm568 = vcmp.eq.f32.partialorder %v170, inf
    %v569 = vsel %vm568, %v170, %v567
    %vm570 = vcmp.eq.f32.partialorder %v170, 0.0
    %v571 = vand.u32 %v170, 2147483648
    %v572 = vsel %vm570, %v571, %v569
    %v573 = vrsqrt.pop %v171
    %v574 = vmul.f32 %v171, %v573
    %vm575 = vcmp.eq.f32.partialorder %v171, inf
    %v576 = vsel %vm575, %v171, %v574
    %vm577 = vcmp.eq.f32.partialorder %v171, 0.0
    %v578 = vand.u32 %v171, 2147483648
    %v579 = vsel %vm577, %v578, %v576
    %v580 = vrsqrt.pop %v174
    %v581 = vmul.f32 %v174, %v580
    %vm582 = vcmp.eq.f32.partialorder %v174, inf
    %v583 = vsel %vm582, %v174, %v581
    %vm584 = vcmp.eq.f32.partialorder %v174, 0.0
    %v585 = vand.u32 %v174, 2147483648
    %v586 = vsel %vm584, %v585, %v583
    %v587 = vrsqrt.pop %v175
    %v588 = vmul.f32 %v175, %v587
    %vm589 = vcmp.eq.f32.partialorder %v175, inf
    %v590 = vsel %vm589, %v175, %v588
    %vm591 = vcmp.eq.f32.partialorder %v175, 0.0
    %v592 = vand.u32 %v175, 2147483648
    %v593 = vsel %vm591, %v592, %v590
    %v594 = vrsqrt.pop %v178
    %v595 = vmul.f32 %v178, %v594
    %vm596 = vcmp.eq.f32.partialorder %v178, inf
    %v597 = vsel %vm596, %v178, %v595
    %vm598 = vcmp.eq.f32.partialorder %v178, 0.0
    %v599 = vand.u32 %v178, 2147483648
    %v600 = vsel %vm598, %v599, %v597
    %v601 = vrsqrt.pop %v179
    %v602 = vmul.f32 %v179, %v601
    %vm603 = vcmp.eq.f32.partialorder %v179, inf
    %v604 = vsel %vm603, %v179, %v602
    %vm605 = vcmp.eq.f32.partialorder %v179, 0.0
    %v606 = vand.u32 %v179, 2147483648
    %v607 = vsel %vm605, %v606, %v604
    %v608 = vrsqrt.pop %v182
    %v609 = vmul.f32 %v182, %v608
    %vm610 = vcmp.eq.f32.partialorder %v182, inf
    %v611 = vsel %vm610, %v182, %v609
    %vm612 = vcmp.eq.f32.partialorder %v182, 0.0
    %v613 = vand.u32 %v182, 2147483648
    %v614 = vsel %vm612, %v613, %v611
    %v615 = vrsqrt.pop %v183
    %v616 = vmul.f32 %v183, %v615
    %vm617 = vcmp.eq.f32.partialorder %v183, inf
    %v618 = vsel %vm617, %v183, %v616
    %vm619 = vcmp.eq.f32.partialorder %v183, 0.0
    %v620 = vand.u32 %v183, 2147483648
    %v621 = vsel %vm619, %v620, %v618
    %v622 = vrsqrt.pop %v186
    %v623 = vmul.f32 %v186, %v622
    %vm624 = vcmp.eq.f32.partialorder %v186, inf
    %v625 = vsel %vm624, %v186, %v623
    %vm626 = vcmp.eq.f32.partialorder %v186, 0.0
    %v627 = vand.u32 %v186, 2147483648
    %v628 = vsel %vm626, %v627, %v625
    %v629 = vrsqrt.pop %v187
    %v630 = vmul.f32 %v187, %v629
    %vm631 = vcmp.eq.f32.partialorder %v187, inf
    %v632 = vsel %vm631, %v187, %v630
    %vm633 = vcmp.eq.f32.partialorder %v187, 0.0
    %v634 = vand.u32 %v187, 2147483648
    %v635 = vsel %vm633, %v634, %v632
    %v636 = vrsqrt.pop %v190
    %v637 = vmul.f32 %v190, %v636
    %vm638 = vcmp.eq.f32.partialorder %v190, inf
    %v639 = vsel %vm638, %v190, %v637
    %vm640 = vcmp.eq.f32.partialorder %v190, 0.0
    %v641 = vand.u32 %v190, 2147483648
    %v642 = vsel %vm640, %v641, %v639
    %v643 = vrsqrt.pop %v191
    %v644 = vmul.f32 %v191, %v643
    %vm645 = vcmp.eq.f32.partialorder %v191, inf
    %v646 = vsel %vm645, %v191, %v644
    %vm647 = vcmp.eq.f32.partialorder %v191, 0.0
    %v648 = vand.u32 %v191, 2147483648
    %v649 = vsel %vm647, %v648, %v646
    %v650 = vrsqrt.pop %v194
    %v651 = vmul.f32 %v194, %v650
    %vm652 = vcmp.eq.f32.partialorder %v194, inf
    %v653 = vsel %vm652, %v194, %v651
    %vm654 = vcmp.eq.f32.partialorder %v194, 0.0
    %v655 = vand.u32 %v194, 2147483648
    %v656 = vsel %vm654, %v655, %v653
    %v657 = vrsqrt.pop %v195
    %v658 = vmul.f32 %v195, %v657
    %vm659 = vcmp.eq.f32.partialorder %v195, inf
    %v660 = vsel %vm659, %v195, %v658
    %vm661 = vcmp.eq.f32.partialorder %v195, 0.0
    %v662 = vand.u32 %v195, 2147483648
    %v663 = vsel %vm661, %v662, %v660
    %v664 = vrsqrt.pop %v198
    %v665 = vmul.f32 %v198, %v664
    %vm666 = vcmp.eq.f32.partialorder %v198, inf
    %v667 = vsel %vm666, %v198, %v665
    %vm668 = vcmp.eq.f32.partialorder %v198, 0.0
    %v669 = vand.u32 %v198, 2147483648
    %v670 = vsel %vm668, %v669, %v667
    %v671 = vrsqrt.pop %v199
    %v672 = vmul.f32 %v199, %v671
    %vm673 = vcmp.eq.f32.partialorder %v199, inf
    %v674 = vsel %vm673, %v199, %v672
    %vm675 = vcmp.eq.f32.partialorder %v199, 0.0
    %v676 = vand.u32 %v199, 2147483648
    %v677 = vsel %vm675, %v676, %v674
    %v678 = vrsqrt.pop %v202
    %v679 = vmul.f32 %v202, %v678
    %vm680 = vcmp.eq.f32.partialorder %v202, inf
    %v681 = vsel %vm680, %v202, %v679
    %vm682 = vcmp.eq.f32.partialorder %v202, 0.0
    %v683 = vand.u32 %v202, 2147483648
    %v684 = vsel %vm682, %v683, %v681
    %v685 = vrsqrt.pop %v203
    %v686 = vmul.f32 %v203, %v685
    %vm687 = vcmp.eq.f32.partialorder %v203, inf
    %v688 = vsel %vm687, %v203, %v686
    %vm689 = vcmp.eq.f32.partialorder %v203, 0.0
    %v690 = vand.u32 %v203, 2147483648
    %v691 = vsel %vm689, %v690, %v688
    %v692 = vrsqrt.pop %v206
    %v693 = vmul.f32 %v206, %v692
    %vm694 = vcmp.eq.f32.partialorder %v206, inf
    %v695 = vsel %vm694, %v206, %v693
    %vm696 = vcmp.eq.f32.partialorder %v206, 0.0
    %v697 = vand.u32 %v206, 2147483648
    %v698 = vsel %vm696, %v697, %v695
    %v699 = vrsqrt.pop %v207
    %v700 = vmul.f32 %v207, %v699
    %vm701 = vcmp.eq.f32.partialorder %v207, inf
    %v702 = vsel %vm701, %v207, %v700
    %vm703 = vcmp.eq.f32.partialorder %v207, 0.0
    %v704 = vand.u32 %v207, 2147483648
    %v705 = vsel %vm703, %v704, %v702
    %v706 = vrsqrt.pop %v210
    %v707 = vmul.f32 %v210, %v706
    %vm708 = vcmp.eq.f32.partialorder %v210, inf
    %v709 = vsel %vm708, %v210, %v707
    %vm710 = vcmp.eq.f32.partialorder %v210, 0.0
    %v711 = vand.u32 %v210, 2147483648
    %v712 = vsel %vm710, %v711, %v709
    %v713 = vrsqrt.pop %v211
    %v714 = vmul.f32 %v211, %v713
    %vm715 = vcmp.eq.f32.partialorder %v211, inf
    %v716 = vsel %vm715, %v211, %v714
    %vm717 = vcmp.eq.f32.partialorder %v211, 0.0
    %v718 = vand.u32 %v211, 2147483648
    %v719 = vsel %vm717, %v718, %v716
    %v720 = vrsqrt.pop %v214
    %v721 = vmul.f32 %v214, %v720
    %vm722 = vcmp.eq.f32.partialorder %v214, inf
    %v723 = vsel %vm722, %v214, %v721
    %vm724 = vcmp.eq.f32.partialorder %v214, 0.0
    %v725 = vand.u32 %v214, 2147483648
    %v726 = vsel %vm724, %v725, %v723
    %v727 = vrsqrt.pop %v215
    %v728 = vmul.f32 %v215, %v727
    %vm729 = vcmp.eq.f32.partialorder %v215, inf
    %v730 = vsel %vm729, %v215, %v728
    %vm731 = vcmp.eq.f32.partialorder %v215, 0.0
    %v732 = vand.u32 %v215, 2147483648
    %v733 = vsel %vm731, %v732, %v730
    %v734 = vrsqrt.pop %v218
    %v735 = vmul.f32 %v218, %v734
    %vm736 = vcmp.eq.f32.partialorder %v218, inf
    %v737 = vsel %vm736, %v218, %v735
    %vm738 = vcmp.eq.f32.partialorder %v218, 0.0
    %v739 = vand.u32 %v218, 2147483648
    %v740 = vsel %vm738, %v739, %v737
    %v741 = vrsqrt.pop %v219
    %v742 = vmul.f32 %v219, %v741
    %vm743 = vcmp.eq.f32.partialorder %v219, inf
    %v744 = vsel %vm743, %v219, %v742
    %vm745 = vcmp.eq.f32.partialorder %v219, 0.0
    %v746 = vand.u32 %v219, 2147483648
    %v747 = vsel %vm745, %v746, %v744
    %v748 = vrsqrt.pop %v222
    %v749 = vmul.f32 %v222, %v748
    %vm750 = vcmp.eq.f32.partialorder %v222, inf
    %v751 = vsel %vm750, %v222, %v749
    %vm752 = vcmp.eq.f32.partialorder %v222, 0.0
    %v753 = vand.u32 %v222, 2147483648
    %v754 = vsel %vm752, %v753, %v751
    %v755 = vrsqrt.pop %v223
    %v756 = vmul.f32 %v223, %v755
    %vm757 = vcmp.eq.f32.partialorder %v223, inf
    %v758 = vsel %vm757, %v223, %v756
    %vm759 = vcmp.eq.f32.partialorder %v223, 0.0
    %v760 = vand.u32 %v223, 2147483648
    %v761 = vsel %vm759, %v760, %v758
    %v762 = vrsqrt.pop %v226
    %v763 = vmul.f32 %v226, %v762
    %vm764 = vcmp.eq.f32.partialorder %v226, inf
    %v765 = vsel %vm764, %v226, %v763
    %vm766 = vcmp.eq.f32.partialorder %v226, 0.0
    %v767 = vand.u32 %v226, 2147483648
    %v768 = vsel %vm766, %v767, %v765
    %v769 = vrsqrt.pop %v227
    %v770 = vmul.f32 %v227, %v769
    %vm771 = vcmp.eq.f32.partialorder %v227, inf
    %v772 = vsel %vm771, %v227, %v770
    %vm773 = vcmp.eq.f32.partialorder %v227, 0.0
    %v774 = vand.u32 %v227, 2147483648
    %v775 = vsel %vm773, %v774, %v772
    %v776 = vrsqrt.pop %v230
    %v777 = vmul.f32 %v230, %v776
    %vm778 = vcmp.eq.f32.partialorder %v230, inf
    %v779 = vsel %vm778, %v230, %v777
    %vm780 = vcmp.eq.f32.partialorder %v230, 0.0
    %v781 = vand.u32 %v230, 2147483648
    %v782 = vsel %vm780, %v781, %v779
    %v783 = vrsqrt.pop %v231
    %v784 = vmul.f32 %v231, %v783
    %vm785 = vcmp.eq.f32.partialorder %v231, inf
    %v786 = vsel %vm785, %v231, %v784
    %vm787 = vcmp.eq.f32.partialorder %v231, 0.0
    %v788 = vand.u32 %v231, 2147483648
    %v789 = vsel %vm787, %v788, %v786
    %v790 = vrsqrt.pop %v234
    %v791 = vmul.f32 %v234, %v790
    %vm792 = vcmp.eq.f32.partialorder %v234, inf
    %v793 = vsel %vm792, %v234, %v791
    %vm794 = vcmp.eq.f32.partialorder %v234, 0.0
    %v795 = vand.u32 %v234, 2147483648
    %v796 = vsel %vm794, %v795, %v793
    %v797 = vrsqrt.pop %v235
    %v798 = vmul.f32 %v235, %v797
    %vm799 = vcmp.eq.f32.partialorder %v235, inf
    %v800 = vsel %vm799, %v235, %v798
    %vm801 = vcmp.eq.f32.partialorder %v235, 0.0
    %v802 = vand.u32 %v235, 2147483648
    %v803 = vsel %vm801, %v802, %v800
    %v804 = vrsqrt.pop %v238
    %v805 = vmul.f32 %v238, %v804
    %vm806 = vcmp.eq.f32.partialorder %v238, inf
    %v807 = vsel %vm806, %v238, %v805
    %vm808 = vcmp.eq.f32.partialorder %v238, 0.0
    %v809 = vand.u32 %v238, 2147483648
    %v810 = vsel %vm808, %v809, %v807
    %v811 = vrsqrt.pop %v239
    %v812 = vmul.f32 %v239, %v811
    %vm813 = vcmp.eq.f32.partialorder %v239, inf
    %v814 = vsel %vm813, %v239, %v812
    %vm815 = vcmp.eq.f32.partialorder %v239, 0.0
    %v816 = vand.u32 %v239, 2147483648
    %v817 = vsel %vm815, %v816, %v814
    %v818 = vrsqrt.pop %v242
    %v819 = vmul.f32 %v242, %v818
    %vm820 = vcmp.eq.f32.partialorder %v242, inf
    %v821 = vsel %vm820, %v242, %v819
    %vm822 = vcmp.eq.f32.partialorder %v242, 0.0
    %v823 = vand.u32 %v242, 2147483648
    %v824 = vsel %vm822, %v823, %v821
    %v825 = vrsqrt.pop %v243
    %v826 = vmul.f32 %v243, %v825
    %vm827 = vcmp.eq.f32.partialorder %v243, inf
    %v828 = vsel %vm827, %v243, %v826
    %vm829 = vcmp.eq.f32.partialorder %v243, 0.0
    %v830 = vand.u32 %v243, 2147483648
    %v831 = vsel %vm829, %v830, %v828
    %v832 = vrsqrt.pop %v246
    %v833 = vmul.f32 %v246, %v832
    %vm834 = vcmp.eq.f32.partialorder %v246, inf
    %v835 = vsel %vm834, %v246, %v833
    %vm836 = vcmp.eq.f32.partialorder %v246, 0.0
    %v837 = vand.u32 %v246, 2147483648
    %v838 = vsel %vm836, %v837, %v835
    %v839 = vrsqrt.pop %v247
    %v840 = vmul.f32 %v247, %v839
    %vm841 = vcmp.eq.f32.partialorder %v247, inf
    %v842 = vsel %vm841, %v247, %v840
    %vm843 = vcmp.eq.f32.partialorder %v247, 0.0
    %v844 = vand.u32 %v247, 2147483648
    %v845 = vsel %vm843, %v844, %v842
    %v846 = vrsqrt.pop %v250
    %v847 = vmul.f32 %v250, %v846
    %vm848 = vcmp.eq.f32.partialorder %v250, inf
    %v849 = vsel %vm848, %v250, %v847
    %vm850 = vcmp.eq.f32.partialorder %v250, 0.0
    %v851 = vand.u32 %v250, 2147483648
    %v852 = vsel %vm850, %v851, %v849
    %v853 = vrsqrt.pop %v251
    %v854 = vmul.f32 %v251, %v853
    %vm855 = vcmp.eq.f32.partialorder %v251, inf
    %v856 = vsel %vm855, %v251, %v854
    %vm857 = vcmp.eq.f32.partialorder %v251, 0.0
    %v858 = vand.u32 %v251, 2147483648
    %v859 = vsel %vm857, %v858, %v856
    %v860 = vrsqrt.pop %v254
    %v861 = vmul.f32 %v254, %v860
    %vm862 = vcmp.eq.f32.partialorder %v254, inf
    %v863 = vsel %vm862, %v254, %v861
    %vm864 = vcmp.eq.f32.partialorder %v254, 0.0
    %v865 = vand.u32 %v254, 2147483648
    %v866 = vsel %vm864, %v865, %v863
    %v867 = vrsqrt.pop %v255
    %v868 = vmul.f32 %v255, %v867
    %vm869 = vcmp.eq.f32.partialorder %v255, inf
    %v870 = vsel %vm869, %v255, %v868
    %vm871 = vcmp.eq.f32.partialorder %v255, 0.0
    %v872 = vand.u32 %v255, 2147483648
    %v873 = vsel %vm871, %v872, %v870
    %v874 = vrsqrt.pop %v258
    %v875 = vmul.f32 %v258, %v874
    %vm876 = vcmp.eq.f32.partialorder %v258, inf
    %v877 = vsel %vm876, %v258, %v875
    %vm878 = vcmp.eq.f32.partialorder %v258, 0.0
    %v879 = vand.u32 %v258, 2147483648
    %v880 = vsel %vm878, %v879, %v877
    %v881 = vrsqrt.pop %v259
    %v882 = vmul.f32 %v259, %v881
    %vm883 = vcmp.eq.f32.partialorder %v259, inf
    %v884 = vsel %vm883, %v259, %v882
    %vm885 = vcmp.eq.f32.partialorder %v259, 0.0
    %v886 = vand.u32 %v259, 2147483648
    %v887 = vsel %vm885, %v886, %v884
    %v888 = vrsqrt.pop %v262
    %v889 = vmul.f32 %v262, %v888
    %vm890 = vcmp.eq.f32.partialorder %v262, inf
    %v891 = vsel %vm890, %v262, %v889
    %vm892 = vcmp.eq.f32.partialorder %v262, 0.0
    %v893 = vand.u32 %v262, 2147483648
    %v894 = vsel %vm892, %v893, %v891
    %v895 = vrsqrt.pop %v263
    %v896 = vmul.f32 %v263, %v895
    %vm897 = vcmp.eq.f32.partialorder %v263, inf
    %v898 = vsel %vm897, %v263, %v896
    %vm899 = vcmp.eq.f32.partialorder %v263, 0.0
    %v900 = vand.u32 %v263, 2147483648
    %v901 = vsel %vm899, %v900, %v898
    %v902 = vrsqrt.pop %v266
    %v903 = vmul.f32 %v266, %v902
    %vm904 = vcmp.eq.f32.partialorder %v266, inf
    %v905 = vsel %vm904, %v266, %v903
    %vm906 = vcmp.eq.f32.partialorder %v266, 0.0
    %v907 = vand.u32 %v266, 2147483648
    %v908 = vsel %vm906, %v907, %v905
    %v909 = vrsqrt.pop %v267
    %v910 = vmul.f32 %v267, %v909
    %vm911 = vcmp.eq.f32.partialorder %v267, inf
    %v912 = vsel %vm911, %v267, %v910
    %vm913 = vcmp.eq.f32.partialorder %v267, 0.0
    %v914 = vand.u32 %v267, 2147483648
    %v915 = vsel %vm913, %v914, %v912
    %v916 = vrsqrt.pop %v270
    %v917 = vmul.f32 %v270, %v916
    %vm918 = vcmp.eq.f32.partialorder %v270, inf
    %v919 = vsel %vm918, %v270, %v917
    %vm920 = vcmp.eq.f32.partialorder %v270, 0.0
    %v921 = vand.u32 %v270, 2147483648
    %v922 = vsel %vm920, %v921, %v919
    %v923 = vrsqrt.pop %v271
    %v924 = vmul.f32 %v271, %v923
    %vm925 = vcmp.eq.f32.partialorder %v271, inf
    %v926 = vsel %vm925, %v271, %v924
    %vm927 = vcmp.eq.f32.partialorder %v271, 0.0
    %v928 = vand.u32 %v271, 2147483648
    %v929 = vsel %vm927, %v928, %v926
    %v930 = vrsqrt.pop %v274
    %v931 = vmul.f32 %v274, %v930
    %vm932 = vcmp.eq.f32.partialorder %v274, inf
    %v933 = vsel %vm932, %v274, %v931
    %vm934 = vcmp.eq.f32.partialorder %v274, 0.0
    %v935 = vand.u32 %v274, 2147483648
    %v936 = vsel %vm934, %v935, %v933
    %v937 = vrsqrt.pop %v275
    %v938 = vmul.f32 %v275, %v937
    %vm939 = vcmp.eq.f32.partialorder %v275, inf
    %v940 = vsel %vm939, %v275, %v938
    %vm941 = vcmp.eq.f32.partialorder %v275, 0.0
    %v942 = vand.u32 %v275, 2147483648
    %v943 = vsel %vm941, %v942, %v940
    %v944 = vrsqrt.pop %v278
    %v945 = vmul.f32 %v278, %v944
    %vm946 = vcmp.eq.f32.partialorder %v278, inf
    %v947 = vsel %vm946, %v278, %v945
    %vm948 = vcmp.eq.f32.partialorder %v278, 0.0
    %v949 = vand.u32 %v278, 2147483648
    %v950 = vsel %vm948, %v949, %v947
    %v951 = vrsqrt.pop %v279
    %v952 = vmul.f32 %v279, %v951
    %vm953 = vcmp.eq.f32.partialorder %v279, inf
    %v954 = vsel %vm953, %v279, %v952
    %vm955 = vcmp.eq.f32.partialorder %v279, 0.0
    %v956 = vand.u32 %v279, 2147483648
    %v957 = vsel %vm955, %v956, %v954
    %v958 = vrsqrt.pop %v282
    %v959 = vmul.f32 %v282, %v958
    %vm960 = vcmp.eq.f32.partialorder %v282, inf
    %v961 = vsel %vm960, %v282, %v959
    %vm962 = vcmp.eq.f32.partialorder %v282, 0.0
    %v963 = vand.u32 %v282, 2147483648
    %v964 = vsel %vm962, %v963, %v961
    %v965 = vrsqrt.pop %v283
    %v966 = vmul.f32 %v283, %v965
    %vm967 = vcmp.eq.f32.partialorder %v283, inf
    %v968 = vsel %vm967, %v283, %v966
    %vm969 = vcmp.eq.f32.partialorder %v283, 0.0
    %v970 = vand.u32 %v283, 2147483648
    %v971 = vsel %vm969, %v970, %v968
    %v972 = vrsqrt.pop %v286
    %v973 = vmul.f32 %v286, %v972
    %vm974 = vcmp.eq.f32.partialorder %v286, inf
    %v975 = vsel %vm974, %v286, %v973
    %vm976 = vcmp.eq.f32.partialorder %v286, 0.0
    %v977 = vand.u32 %v286, 2147483648
    %v978 = vsel %vm976, %v977, %v975
    %v979 = vrsqrt.pop %v287
    %v980 = vmul.f32 %v287, %v979
    %vm981 = vcmp.eq.f32.partialorder %v287, inf
    %v982 = vsel %vm981, %v287, %v980
    %vm983 = vcmp.eq.f32.partialorder %v287, 0.0
    %v984 = vand.u32 %v287, 2147483648
    %v985 = vsel %vm983, %v984, %v982
    %v986 = vrsqrt.pop %v290
    %v987 = vmul.f32 %v290, %v986
    %vm988 = vcmp.eq.f32.partialorder %v290, inf
    %v989 = vsel %vm988, %v290, %v987
    %vm990 = vcmp.eq.f32.partialorder %v290, 0.0
    %v991 = vand.u32 %v290, 2147483648
    %v992 = vsel %vm990, %v991, %v989
    %v993 = vrsqrt.pop %v291
    %v994 = vmul.f32 %v291, %v993
    %vm995 = vcmp.eq.f32.partialorder %v291, inf
    %v996 = vsel %vm995, %v291, %v994
    %vm997 = vcmp.eq.f32.partialorder %v291, 0.0
    %v998 = vand.u32 %v291, 2147483648
    %v999 = vsel %vm997, %v998, %v996
    %v1000 = vsub.f32 %v558, %v782
    %v1001 = vsub.f32 %v565, %v789
    %v1002 = vsub.f32 %v572, %v796
    %v1003 = vsub.f32 %v579, %v803
    %v1004 = vsub.f32 %v586, %v810
    %v1005 = vsub.f32 %v593, %v817
    %v1006 = vsub.f32 %v600, %v824
    %v1007 = vsub.f32 %v607, %v831
    %v1008 = vsub.f32 %v614, %v838
    %v1009 = vsub.f32 %v621, %v845
    %v1010 = vsub.f32 %v628, %v852
    %v1011 = vsub.f32 %v635, %v859
    %v1012 = vsub.f32 %v642, %v866
    %v1013 = vsub.f32 %v649, %v873
    %v1014 = vsub.f32 %v656, %v880
    %v1015 = vsub.f32 %v663, %v887
    %v1016 = vsub.f32 %v670, %v894
    %v1017 = vsub.f32 %v677, %v901
    %v1018 = vsub.f32 %v684, %v908
    %v1019 = vsub.f32 %v691, %v915
    %v1020 = vsub.f32 %v698, %v922
    %v1021 = vsub.f32 %v705, %v929
    %v1022 = vsub.f32 %v712, %v936
    %v1023 = vsub.f32 %v719, %v943
    %v1024 = vsub.f32 %v726, %v950
    %v1025 = vsub.f32 %v733, %v957
    %v1026 = vsub.f32 %v740, %v964
    %v1027 = vsub.f32 %v747, %v971
    %v1028 = vsub.f32 %v754, %v978
    %v1029 = vsub.f32 %v761, %v985
    %v1030 = vsub.f32 %v768, %v992
    %v1031 = vsub.f32 %v775, %v999
    %v1032 = vstv %s295
    %v1033 = vadd.s32 %v1032, 1
    %v1034 = vadd.s32 %v1032, 2
    %v1035 = vadd.s32 %v1032, 3
    %v1036 = vadd.s32 %v1032, 4
    %v1037 = vadd.s32 %v1032, 5
    %v1038 = vadd.s32 %v1032, 6
    %v1039 = vadd.s32 %v1032, 7
    %v1040 = vadd.s32 %v1032, 8
    %v1041 = vadd.s32 %v1032, 9
    %v1042 = vadd.s32 %v1032, 10
    %v1043 = vadd.s32 %v1032, 11
    %v1044 = vadd.s32 %v1032, 12
    %v1045 = vadd.s32 %v1032, 13
    %v1046 = vadd.s32 %v1032, 14
    %v1047 = vadd.s32 %v1032, 15
    %vm1048 = vcmp.lt.s32.totalorder %v1032, 8
    %vm1049 = vcmp.lt.s32.totalorder %v1033, 8
    %vm1050 = vcmp.lt.s32.totalorder %v1034, 8
    %vm1051 = vcmp.lt.s32.totalorder %v1035, 8
    %vm1052 = vcmp.lt.s32.totalorder %v1036, 8
    %vm1053 = vcmp.lt.s32.totalorder %v1037, 8
    %vm1054 = vcmp.lt.s32.totalorder %v1038, 8
    %vm1055 = vcmp.lt.s32.totalorder %v1039, 8
    %vm1056 = vcmp.lt.s32.totalorder %v1040, 8
    %vm1057 = vcmp.lt.s32.totalorder %v1041, 8
    %vm1058 = vcmp.lt.s32.totalorder %v1042, 8
    %vm1059 = vcmp.lt.s32.totalorder %v1043, 8
    %vm1060 = vcmp.lt.s32.totalorder %v1044, 8
    %vm1061 = vcmp.lt.s32.totalorder %v1045, 8
    %vm1062 = vcmp.lt.s32.totalorder %v1046, 8
    %vm1063 = vcmp.lt.s32.totalorder %v1047, 8
    %v1064 = vmul.f32 %v1000, %v1000
    %v1065 = vmul.f32 %v1001, %v1001
    %v1066 = vmul.f32 %v1002, %v1002
    %v1067 = vmul.f32 %v1003, %v1003
    %v1068 = vmul.f32 %v1004, %v1004
    %v1069 = vmul.f32 %v1005, %v1005
    %v1070 = vmul.f32 %v1006, %v1006
    %v1071 = vmul.f32 %v1007, %v1007
    %v1072 = vmul.f32 %v1008, %v1008
    %v1073 = vmul.f32 %v1009, %v1009
    %v1074 = vmul.f32 %v1010, %v1010
    %v1075 = vmul.f32 %v1011, %v1011
    %v1076 = vmul.f32 %v1012, %v1012
    %v1077 = vmul.f32 %v1013, %v1013
    %v1078 = vmul.f32 %v1014, %v1014
    %v1079 = vmul.f32 %v1015, %v1015
    %v1080 = vmul.f32 %v1016, %v1016
    %v1081 = vmul.f32 %v1017, %v1017
    %v1082 = vmul.f32 %v1018, %v1018
    %v1083 = vmul.f32 %v1019, %v1019
    %v1084 = vmul.f32 %v1020, %v1020
    %v1085 = vmul.f32 %v1021, %v1021
    %v1086 = vmul.f32 %v1022, %v1022
    %v1087 = vmul.f32 %v1023, %v1023
    %v1088 = vmul.f32 %v1024, %v1024
    %v1089 = vmul.f32 %v1025, %v1025
    %v1090 = vmul.f32 %v1026, %v1026
    %v1091 = vmul.f32 %v1027, %v1027
    %v1092 = vmul.f32 %v1028, %v1028
    %v1093 = vmul.f32 %v1029, %v1029
    %v1094 = vmul.f32 %v1030, %v1030
    %v1095 = vmul.f32 %v1031, %v1031
    %v1096 = vsel %vm1048, %v360, %v1064
    %v1097 = vsel %vm1048, %v361, %v1065
    %v1098 = vsel %vm1049, %v362, %v1066
    %v1099 = vsel %vm1049, %v363, %v1067
    %v1100 = vsel %vm1050, %v364, %v1068
    %v1101 = vsel %vm1050, %v365, %v1069
    %v1102 = vsel %vm1051, %v366, %v1070
    %v1103 = vsel %vm1051, %v367, %v1071
    %v1104 = vsel %vm1052, %v368, %v1072
    %v1105 = vsel %vm1052, %v369, %v1073
    %v1106 = vsel %vm1053, %v370, %v1074
    %v1107 = vsel %vm1053, %v371, %v1075
    %v1108 = vsel %vm1054, %v372, %v1076
    %v1109 = vsel %vm1054, %v373, %v1077
    %v1110 = vsel %vm1055, %v374, %v1078
    %v1111 = vsel %vm1055, %v375, %v1079
    %v1112 = vsel %vm1056, %v376, %v1080
    %v1113 = vsel %vm1056, %v377, %v1081
    %v1114 = vsel %vm1057, %v378, %v1082
    %v1115 = vsel %vm1057, %v379, %v1083
    %v1116 = vsel %vm1058, %v380, %v1084
    %v1117 = vsel %vm1058, %v381, %v1085
    %v1118 = vsel %vm1059, %v382, %v1086
    %v1119 = vsel %vm1059, %v383, %v1087
    %v1120 = vsel %vm1060, %v384, %v1088
    %v1121 = vsel %vm1060, %v385, %v1089
    %v1122 = vsel %vm1061, %v386, %v1090
    %v1123 = vsel %vm1061, %v387, %v1091
    %v1124 = vsel %vm1062, %v388, %v1092
    %v1125 = vsel %vm1062, %v389, %v1093
    %v1126 = vsel %vm1063, %v390, %v1094
    %v1127 = vsel %vm1063, %v391, %v1095
    %v1128 = vmul.f32 %v1096, 5.0
    %v1129 = vmul.f32 %v1097, 5.0
    %v1130 = vmul.f32 %v1098, 5.0
    %v1131 = vmul.f32 %v1099, 5.0
    %v1132 = vmul.f32 %v1100, 5.0
    %v1133 = vmul.f32 %v1101, 5.0
    %v1134 = vmul.f32 %v1102, 5.0
    %v1135 = vmul.f32 %v1103, 5.0
    %v1136 = vmul.f32 %v1104, 5.0
    %v1137 = vmul.f32 %v1105, 5.0
    %v1138 = vmul.f32 %v1106, 5.0
    %v1139 = vmul.f32 %v1107, 5.0
    %v1140 = vmul.f32 %v1108, 5.0
    %v1141 = vmul.f32 %v1109, 5.0
    %v1142 = vmul.f32 %v1110, 5.0
    %v1143 = vmul.f32 %v1111, 5.0
    %v1144 = vmul.f32 %v1112, 5.0
    %v1145 = vmul.f32 %v1113, 5.0
    %v1146 = vmul.f32 %v1114, 5.0
    %v1147 = vmul.f32 %v1115, 5.0
    %v1148 = vmul.f32 %v1116, 5.0
    %v1149 = vmul.f32 %v1117, 5.0
    %v1150 = vmul.f32 %v1118, 5.0
    %v1151 = vmul.f32 %v1119, 5.0
    %v1152 = vmul.f32 %v1120, 5.0
    %v1153 = vmul.f32 %v1121, 5.0
    %v1154 = vmul.f32 %v1122, 5.0
    %v1155 = vmul.f32 %v1123, 5.0
    %v1156 = vmul.f32 %v1124, 5.0
    %v1157 = vmul.f32 %v1125, 5.0
    %v1158 = vmul.f32 %v1126, 5.0
    %v1159 = vmul.f32 %v1127, 5.0
    %v1160 = vsub.f32 %v168, %v232
    %v1161 = vsub.f32 %v169, %v233
    %v1162 = vsub.f32 %v172, %v236
    %v1163 = vsub.f32 %v173, %v237
    %v1164 = vsub.f32 %v176, %v240
    %v1165 = vsub.f32 %v177, %v241
    %v1166 = vsub.f32 %v180, %v244
    %v1167 = vsub.f32 %v181, %v245
    %v1168 = vsub.f32 %v184, %v248
    %v1169 = vsub.f32 %v185, %v249
    %v1170 = vsub.f32 %v188, %v252
    %v1171 = vsub.f32 %v189, %v253
    %v1172 = vsub.f32 %v192, %v256
    %v1173 = vsub.f32 %v193, %v257
    %v1174 = vsub.f32 %v196, %v260
    %v1175 = vsub.f32 %v197, %v261
    %v1176 = vsub.f32 %v200, %v264
    %v1177 = vsub.f32 %v201, %v265
    %v1178 = vsub.f32 %v204, %v268
    %v1179 = vsub.f32 %v205, %v269
    %v1180 = vsub.f32 %v208, %v272
    %v1181 = vsub.f32 %v209, %v273
    %v1182 = vsub.f32 %v212, %v276
    %v1183 = vsub.f32 %v213, %v277
    %v1184 = vsub.f32 %v216, %v280
    %v1185 = vsub.f32 %v217, %v281
    %v1186 = vsub.f32 %v220, %v284
    %v1187 = vsub.f32 %v221, %v285
    %v1188 = vsub.f32 %v224, %v288
    %v1189 = vsub.f32 %v225, %v289
    %v1190 = vsub.f32 %v228, %v292
    %v1191 = vsub.f32 %v229, %v293
    %v1192 = vmul.f32 %v1160, %v1160
    %v1193 = vmul.f32 %v1161, %v1161
    %v1194 = vmul.f32 %v1162, %v1162
    %v1195 = vmul.f32 %v1163, %v1163
    %v1196 = vmul.f32 %v1164, %v1164
    %v1197 = vmul.f32 %v1165, %v1165
    %v1198 = vmul.f32 %v1166, %v1166
    %v1199 = vmul.f32 %v1167, %v1167
    %v1200 = vmul.f32 %v1168, %v1168
    %v1201 = vmul.f32 %v1169, %v1169
    %v1202 = vmul.f32 %v1170, %v1170
    %v1203 = vmul.f32 %v1171, %v1171
    %v1204 = vmul.f32 %v1172, %v1172
    %v1205 = vmul.f32 %v1173, %v1173
    %v1206 = vmul.f32 %v1174, %v1174
    %v1207 = vmul.f32 %v1175, %v1175
    %v1208 = vmul.f32 %v1176, %v1176
    %v1209 = vmul.f32 %v1177, %v1177
    %v1210 = vmul.f32 %v1178, %v1178
    %v1211 = vmul.f32 %v1179, %v1179
    %v1212 = vmul.f32 %v1180, %v1180
    %v1213 = vmul.f32 %v1181, %v1181
    %v1214 = vmul.f32 %v1182, %v1182
    %v1215 = vmul.f32 %v1183, %v1183
    %v1216 = vmul.f32 %v1184, %v1184
    %v1217 = vmul.f32 %v1185, %v1185
    %v1218 = vmul.f32 %v1186, %v1186
    %v1219 = vmul.f32 %v1187, %v1187
    %v1220 = vmul.f32 %v1188, %v1188
    %v1221 = vmul.f32 %v1189, %v1189
    %v1222 = vmul.f32 %v1190, %v1190
    %v1223 = vmul.f32 %v1191, %v1191
    %v1224 = vld [vmem:[#allocation2] sm:$0x3]
    %v1225 = vld [vmem:[#allocation2 + $0x2] sm:$0x3]
    %v1226 = vld [vmem:[#allocation2 + $0x4] sm:$0x3]
    %v1227 = vld [vmem:[#allocation2 + $0x6] sm:$0x3]
    %v1228 = vld [vmem:[#allocation2 + $0x8] sm:$0x3]
    %v1229 = vld [vmem:[#allocation2 + $0xa] sm:$0x3]
    %v1230 = vld [vmem:[#allocation2 + $0xc] sm:$0x3]
    %v1231 = vld [vmem:[#allocation2 + $0xe] sm:$0x3]
    %v1232 = vld [vmem:[#allocation2 + $0x10] sm:$0x3]
    %v1233 = vld [vmem:[#allocation2 + $0x12] sm:$0x3]
    %v1234 = vld [vmem:[#allocation2 + $0x14] sm:$0x3]
    %v1235 = vld [vmem:[#allocation2 + $0x16] sm:$0x3]
    %v1236 = vld [vmem:[#allocation2 + $0x18] sm:$0x3]
    %v1237 = vld [vmem:[#allocation2 + $0x1a] sm:$0x3]
    %v1238 = vld [vmem:[#allocation2 + $0x1c] sm:$0x3]
    %v1239 = vld [vmem:[#allocation2 + $0x1e] sm:$0x3]
    %v1272 = vcombine.low %v520, %v521
    %v1274 = vunpack.c.l.s4 1966171168
    %v1275 = vunpack.c.0.s8 %v1274
    %v1276 = vlaneseq
    %v1277 = vshrl.u32 %v1276, 7
    %v1278 = vsub.s32 %v1275, %v1277
    %v1279 = vrot.slane %v1272, %v1278
    %v1281 = vunpack.c.l.s4 1966171168
    %v1282 = vunpack.c.0.s8 %v1281
    %v1283 = vlaneseq
    %v1284 = vshrl.u32 %v1283, 7
    %v1285 = vsub.s32 %v1282, %v1284
    %v1286 = vrot.slane %v1279, %v1285
    %v1287 = vcombine.low %v522, %v523
    %v1289 = vunpack.c.l.s4 1966171168
    %v1290 = vunpack.c.0.s8 %v1289
    %v1291 = vlaneseq
    %v1292 = vshrl.u32 %v1291, 7
    %v1293 = vsub.s32 %v1290, %v1292
    %v1294 = vrot.slane %v1287, %v1293
    %v1296 = vunpack.c.l.s4 1966171168
    %v1297 = vunpack.c.0.s8 %v1296
    %v1298 = vlaneseq
    %v1299 = vshrl.u32 %v1298, 7
    %v1300 = vsub.s32 %v1297, %v1299
    %v1301 = vrot.slane %v1294, %v1300
    %v1302 = vcombine.low %v524, %v525
    %v1304 = vunpack.c.l.s4 1966171168
    %v1305 = vunpack.c.0.s8 %v1304
    %v1306 = vlaneseq
    %v1307 = vshrl.u32 %v1306, 7
    %v1308 = vsub.s32 %v1305, %v1307
    %v1309 = vrot.slane %v1302, %v1308
    %v1311 = vunpack.c.l.s4 1966171168
    %v1312 = vunpack.c.0.s8 %v1311
    %v1313 = vlaneseq
    %v1314 = vshrl.u32 %v1313, 7
    %v1315 = vsub.s32 %v1312, %v1314
    %v1316 = vrot.slane %v1309, %v1315
    %v1317 = vcombine.low %v526, %v527
    %v1319 = vunpack.c.l.s4 1966171168
    %v1320 = vunpack.c.0.s8 %v1319
    %v1321 = vlaneseq
    %v1322 = vshrl.u32 %v1321, 7
    %v1323 = vsub.s32 %v1320, %v1322
    %v1324 = vrot.slane %v1317, %v1323
    %v1326 = vunpack.c.l.s4 1966171168
    %v1327 = vunpack.c.0.s8 %v1326
    %v1328 = vlaneseq
    %v1329 = vshrl.u32 %v1328, 7
    %v1330 = vsub.s32 %v1327, %v1329
    %v1331 = vrot.slane %v1324, %v1330
    %v1332 = vcombine.low %v528, %v529
    %v1334 = vunpack.c.l.s4 1966171168
    %v1335 = vunpack.c.0.s8 %v1334
    %v1336 = vlaneseq
    %v1337 = vshrl.u32 %v1336, 7
    %v1338 = vsub.s32 %v1335, %v1337
    %v1339 = vrot.slane %v1332, %v1338
    %v1341 = vunpack.c.l.s4 1966171168
    %v1342 = vunpack.c.0.s8 %v1341
    %v1343 = vlaneseq
    %v1344 = vshrl.u32 %v1343, 7
    %v1345 = vsub.s32 %v1342, %v1344
    %v1346 = vrot.slane %v1339, %v1345
    %v1347 = vcombine.low %v530, %v531
    %v1349 = vunpack.c.l.s4 1966171168
    %v1350 = vunpack.c.0.s8 %v1349
    %v1351 = vlaneseq
    %v1352 = vshrl.u32 %v1351, 7
    %v1353 = vsub.s32 %v1350, %v1352
    %v1354 = vrot.slane %v1347, %v1353
    %v1356 = vunpack.c.l.s4 1966171168
    %v1357 = vunpack.c.0.s8 %v1356
    %v1358 = vlaneseq
    %v1359 = vshrl.u32 %v1358, 7
    %v1360 = vsub.s32 %v1357, %v1359
    %v1361 = vrot.slane %v1354, %v1360
    %v1362 = vcombine.low %v532, %v533
    %v1364 = vunpack.c.l.s4 1966171168
    %v1365 = vunpack.c.0.s8 %v1364
    %v1366 = vlaneseq
    %v1367 = vshrl.u32 %v1366, 7
    %v1368 = vsub.s32 %v1365, %v1367
    %v1369 = vrot.slane %v1362, %v1368
    %v1371 = vunpack.c.l.s4 1966171168
    %v1372 = vunpack.c.0.s8 %v1371
    %v1373 = vlaneseq
    %v1374 = vshrl.u32 %v1373, 7
    %v1375 = vsub.s32 %v1372, %v1374
    %v1376 = vrot.slane %v1369, %v1375
    %v1377 = vcombine.low %v534, %v535
    %v1379 = vunpack.c.l.s4 1966171168
    %v1380 = vunpack.c.0.s8 %v1379
    %v1381 = vlaneseq
    %v1382 = vshrl.u32 %v1381, 7
    %v1383 = vsub.s32 %v1380, %v1382
    %v1384 = vrot.slane %v1377, %v1383
    %v1386 = vunpack.c.l.s4 1966171168
    %v1387 = vunpack.c.0.s8 %v1386
    %v1388 = vlaneseq
    %v1389 = vshrl.u32 %v1388, 7
    %v1390 = vsub.s32 %v1387, %v1389
    %v1391 = vrot.slane %v1384, %v1390
    %v1392 = vcombine.low %v536, %v537
    %v1394 = vunpack.c.l.s4 1966171168
    %v1395 = vunpack.c.0.s8 %v1394
    %v1396 = vlaneseq
    %v1397 = vshrl.u32 %v1396, 7
    %v1398 = vsub.s32 %v1395, %v1397
    %v1399 = vrot.slane %v1392, %v1398
    %v1401 = vunpack.c.l.s4 1966171168
    %v1402 = vunpack.c.0.s8 %v1401
    %v1403 = vlaneseq
    %v1404 = vshrl.u32 %v1403, 7
    %v1405 = vsub.s32 %v1402, %v1404
    %v1406 = vrot.slane %v1399, %v1405
    %v1407 = vcombine.low %v538, %v539
    %v1409 = vunpack.c.l.s4 1966171168
    %v1410 = vunpack.c.0.s8 %v1409
    %v1411 = vlaneseq
    %v1412 = vshrl.u32 %v1411, 7
    %v1413 = vsub.s32 %v1410, %v1412
    %v1414 = vrot.slane %v1407, %v1413
    %v1416 = vunpack.c.l.s4 1966171168
    %v1417 = vunpack.c.0.s8 %v1416
    %v1418 = vlaneseq
    %v1419 = vshrl.u32 %v1418, 7
    %v1420 = vsub.s32 %v1417, %v1419
    %v1421 = vrot.slane %v1414, %v1420
    %v1422 = vcombine.low %v540, %v541
    %v1424 = vunpack.c.l.s4 1966171168
    %v1425 = vunpack.c.0.s8 %v1424
    %v1426 = vlaneseq
    %v1427 = vshrl.u32 %v1426, 7
    %v1428 = vsub.s32 %v1425, %v1427
    %v1429 = vrot.slane %v1422, %v1428
    %v1431 = vunpack.c.l.s4 1966171168
    %v1432 = vunpack.c.0.s8 %v1431
    %v1433 = vlaneseq
    %v1434 = vshrl.u32 %v1433, 7
    %v1435 = vsub.s32 %v1432, %v1434
    %v1436 = vrot.slane %v1429, %v1435
    %v1437 = vcombine.low %v542, %v543
    %v1439 = vunpack.c.l.s4 1966171168
    %v1440 = vunpack.c.0.s8 %v1439
    %v1441 = vlaneseq
    %v1442 = vshrl.u32 %v1441, 7
    %v1443 = vsub.s32 %v1440, %v1442
    %v1444 = vrot.slane %v1437, %v1443
    %v1446 = vunpack.c.l.s4 1966171168
    %v1447 = vunpack.c.0.s8 %v1446
    %v1448 = vlaneseq
    %v1449 = vshrl.u32 %v1448, 7
    %v1450 = vsub.s32 %v1447, %v1449
    %v1451 = vrot.slane %v1444, %v1450
    %v1452 = vcombine.low %v544, %v545
    %v1454 = vunpack.c.l.s4 1966171168
    %v1455 = vunpack.c.0.s8 %v1454
    %v1456 = vlaneseq
    %v1457 = vshrl.u32 %v1456, 7
    %v1458 = vsub.s32 %v1455, %v1457
    %v1459 = vrot.slane %v1452, %v1458
    %v1461 = vunpack.c.l.s4 1966171168
    %v1462 = vunpack.c.0.s8 %v1461
    %v1463 = vlaneseq
    %v1464 = vshrl.u32 %v1463, 7
    %v1465 = vsub.s32 %v1462, %v1464
    %v1466 = vrot.slane %v1459, %v1465
    %v1467 = vcombine.low %v546, %v547
    %v1469 = vunpack.c.l.s4 1966171168
    %v1470 = vunpack.c.0.s8 %v1469
    %v1471 = vlaneseq
    %v1472 = vshrl.u32 %v1471, 7
    %v1473 = vsub.s32 %v1470, %v1472
    %v1474 = vrot.slane %v1467, %v1473
    %v1476 = vunpack.c.l.s4 1966171168
    %v1477 = vunpack.c.0.s8 %v1476
    %v1478 = vlaneseq
    %v1479 = vshrl.u32 %v1478, 7
    %v1480 = vsub.s32 %v1477, %v1479
    %v1481 = vrot.slane %v1474, %v1480
    %v1482 = vcombine.low %v548, %v549
    %v1484 = vunpack.c.l.s4 1966171168
    %v1485 = vunpack.c.0.s8 %v1484
    %v1486 = vlaneseq
    %v1487 = vshrl.u32 %v1486, 7
    %v1488 = vsub.s32 %v1485, %v1487
    %v1489 = vrot.slane %v1482, %v1488
    %v1491 = vunpack.c.l.s4 1966171168
    %v1492 = vunpack.c.0.s8 %v1491
    %v1493 = vlaneseq
    %v1494 = vshrl.u32 %v1493, 7
    %v1495 = vsub.s32 %v1492, %v1494
    %v1496 = vrot.slane %v1489, %v1495
    %v1497 = vcombine.low %v550, %v551
    %v1499 = vunpack.c.l.s4 1966171168
    %v1500 = vunpack.c.0.s8 %v1499
    %v1501 = vlaneseq
    %v1502 = vshrl.u32 %v1501, 7
    %v1503 = vsub.s32 %v1500, %v1502
    %v1504 = vrot.slane %v1497, %v1503
    %v1506 = vunpack.c.l.s4 1966171168
    %v1507 = vunpack.c.0.s8 %v1506
    %v1508 = vlaneseq
    %v1509 = vshrl.u32 %v1508, 7
    %v1510 = vsub.s32 %v1507, %v1509
    %v1511 = vrot.slane %v1504, %v1510
    %v1528 = vadd.f32 %v1224, %v1286
    %v1529 = vadd.f32 %v1225, %v1301
    %v1530 = vadd.f32 %v1226, %v1316
    %v1531 = vadd.f32 %v1227, %v1331
    %v1532 = vadd.f32 %v1228, %v1346
    %v1533 = vadd.f32 %v1229, %v1361
    %v1534 = vadd.f32 %v1230, %v1376
    %v1535 = vadd.f32 %v1231, %v1391
    %v1536 = vadd.f32 %v1232, %v1406
    %v1537 = vadd.f32 %v1233, %v1421
    %v1538 = vadd.f32 %v1234, %v1436
    %v1539 = vadd.f32 %v1235, %v1451
    %v1540 = vadd.f32 %v1236, %v1466
    %v1541 = vadd.f32 %v1237, %v1481
    %v1542 = vadd.f32 %v1238, %v1496
    %v1543 = vadd.f32 %v1239, %v1511
    %v1544 = vlaneseq
    %vm1545 = vcmp.ge.s32.totalorder %v1544, 0
    %vm1546 = vcmp.lt.s32.totalorder %v1544, 256
    %vm1547 = vmand %vm1545, %vm1546
    %1548 = vst.msk [vmem:[#allocation2] sm:$0x3] %vm1547, %v1528
    %1549 = vst.msk [vmem:[#allocation2 + $0x2] sm:$0x3] %vm1547, %v1529
    %1550 = vst.msk [vmem:[#allocation2 + $0x4] sm:$0x3] %vm1547, %v1530
    %1551 = vst.msk [vmem:[#allocation2 + $0x6] sm:$0x3] %vm1547, %v1531
    %1552 = vst.msk [vmem:[#allocation2 + $0x8] sm:$0x3] %vm1547, %v1532
    %1553 = vst.msk [vmem:[#allocation2 + $0xa] sm:$0x3] %vm1547, %v1533
    %1554 = vst.msk [vmem:[#allocation2 + $0xc] sm:$0x3] %vm1547, %v1534
    %1555 = vst.msk [vmem:[#allocation2 + $0xe] sm:$0x3] %vm1547, %v1535
    %1556 = vst.msk [vmem:[#allocation2 + $0x10] sm:$0x3] %vm1547, %v1536
    %1557 = vst.msk [vmem:[#allocation2 + $0x12] sm:$0x3] %vm1547, %v1537
    %1558 = vst.msk [vmem:[#allocation2 + $0x14] sm:$0x3] %vm1547, %v1538
    %1559 = vst.msk [vmem:[#allocation2 + $0x16] sm:$0x3] %vm1547, %v1539
    %1560 = vst.msk [vmem:[#allocation2 + $0x18] sm:$0x3] %vm1547, %v1540
    %1561 = vst.msk [vmem:[#allocation2 + $0x1a] sm:$0x3] %vm1547, %v1541
    %1562 = vst.msk [vmem:[#allocation2 + $0x1c] sm:$0x3] %vm1547, %v1542
    %1563 = vst.msk [vmem:[#allocation2 + $0x1e] sm:$0x3] %vm1547, %v1543
    %v1564 = vld [vmem:[#allocation3] sm:$0xff]
    %v1565 = vld [vmem:[#allocation3 + $0x8] sm:$0xff]
    %v1566 = vld [vmem:[#allocation3 + $0x10] sm:$0xff]
    %v1567 = vld [vmem:[#allocation3 + $0x18] sm:$0xff]
    %v1568 = vld [vmem:[#allocation3 + $0x20] sm:$0xff]
    %v1569 = vld [vmem:[#allocation3 + $0x28] sm:$0xff]
    %v1570 = vld [vmem:[#allocation3 + $0x30] sm:$0xff]
    %v1571 = vld [vmem:[#allocation3 + $0x38] sm:$0xff]
    %v1572 = vld [vmem:[#allocation3 + $0x40] sm:$0xff]
    %v1573 = vld [vmem:[#allocation3 + $0x48] sm:$0xff]
    %v1574 = vld [vmem:[#allocation3 + $0x50] sm:$0xff]
    %v1575 = vld [vmem:[#allocation3 + $0x58] sm:$0xff]
    %v1576 = vld [vmem:[#allocation3 + $0x60] sm:$0xff]
    %v1577 = vld [vmem:[#allocation3 + $0x68] sm:$0xff]
    %v1578 = vld [vmem:[#allocation3 + $0x70] sm:$0xff]
    %v1579 = vld [vmem:[#allocation3 + $0x78] sm:$0xff]
    %v1612 = vcombine.low %v1128, %v1129
    %v1613 = vcombine.high %v1128, %v1129
    %v1614 = vcombine.low %v1130, %v1131
    %v1615 = vcombine.high %v1130, %v1131
    %v1616 = vcombine.low %v1132, %v1133
    %v1617 = vcombine.high %v1132, %v1133
    %v1618 = vcombine.low %v1134, %v1135
    %v1619 = vcombine.high %v1134, %v1135
    %v1620 = vcombine.low %v1136, %v1137
    %v1621 = vcombine.high %v1136, %v1137
    %v1622 = vcombine.low %v1138, %v1139
    %v1623 = vcombine.high %v1138, %v1139
    %v1624 = vcombine.low %v1140, %v1141
    %v1625 = vcombine.high %v1140, %v1141
    %v1626 = vcombine.low %v1142, %v1143
    %v1627 = vcombine.high %v1142, %v1143
    %v1628 = vcombine.low %v1144, %v1145
    %v1629 = vcombine.high %v1144, %v1145
    %v1630 = vcombine.low %v1146, %v1147
    %v1631 = vcombine.high %v1146, %v1147
    %v1632 = vcombine.low %v1148, %v1149
    %v1633 = vcombine.high %v1148, %v1149
    %v1634 = vcombine.low %v1150, %v1151
    %v1635 = vcombine.high %v1150, %v1151
    %v1636 = vcombine.low %v1152, %v1153
    %v1637 = vcombine.high %v1152, %v1153
    %v1638 = vcombine.low %v1154, %v1155
    %v1639 = vcombine.high %v1154, %v1155
    %v1640 = vcombine.low %v1156, %v1157
    %v1641 = vcombine.high %v1156, %v1157
    %v1642 = vcombine.low %v1158, %v1159
    %v1643 = vcombine.high %v1158, %v1159
    %vm1644 = vcmask 1042432
    %vm1645 = vcmask 1046532
    %vm1646 = vmor %vm1644, %vm1645
    %v1647 = vrot.slane %v1612, 5
    %v1648 = vrot.slane %v1647, 4
    %v1649 = vrot.slane %v1613, 5
    %v1650 = vsel %vm1646, %v1648, %v1649
    %v1651 = vrot.slane %v1614, 5
    %v1652 = vrot.slane %v1651, 4
    %v1653 = vrot.slane %v1615, 5
    %v1654 = vsel %vm1646, %v1652, %v1653
    %v1655 = vrot.slane %v1616, 5
    %v1656 = vrot.slane %v1655, 4
    %v1657 = vrot.slane %v1617, 5
    %v1658 = vsel %vm1646, %v1656, %v1657
    %v1659 = vrot.slane %v1618, 5
    %v1660 = vrot.slane %v1659, 4
    %v1661 = vrot.slane %v1619, 5
    %v1662 = vsel %vm1646, %v1660, %v1661
    %v1663 = vrot.slane %v1620, 5
    %v1664 = vrot.slane %v1663, 4
    %v1665 = vrot.slane %v1621, 5
    %v1666 = vsel %vm1646, %v1664, %v1665
    %v1667 = vrot.slane %v1622, 5
    %v1668 = vrot.slane %v1667, 4
    %v1669 = vrot.slane %v1623, 5
    %v1670 = vsel %vm1646, %v1668, %v1669
    %v1671 = vrot.slane %v1624, 5
    %v1672 = vrot.slane %v1671, 4
    %v1673 = vrot.slane %v1625, 5
    %v1674 = vsel %vm1646, %v1672, %v1673
    %v1675 = vrot.slane %v1626, 5
    %v1676 = vrot.slane %v1675, 4
    %v1677 = vrot.slane %v1627, 5
    %v1678 = vsel %vm1646, %v1676, %v1677
    %v1679 = vrot.slane %v1628, 5
    %v1680 = vrot.slane %v1679, 4
    %v1681 = vrot.slane %v1629, 5
    %v1682 = vsel %vm1646, %v1680, %v1681
    %v1683 = vrot.slane %v1630, 5
    %v1684 = vrot.slane %v1683, 4
    %v1685 = vrot.slane %v1631, 5
    %v1686 = vsel %vm1646, %v1684, %v1685
    %v1687 = vrot.slane %v1632, 5
    %v1688 = vrot.slane %v1687, 4
    %v1689 = vrot.slane %v1633, 5
    %v1690 = vsel %vm1646, %v1688, %v1689
    %v1691 = vrot.slane %v1634, 5
    %v1692 = vrot.slane %v1691, 4
    %v1693 = vrot.slane %v1635, 5
    %v1694 = vsel %vm1646, %v1692, %v1693
    %v1695 = vrot.slane %v1636, 5
    %v1696 = vrot.slane %v1695, 4
    %v1697 = vrot.slane %v1637, 5
    %v1698 = vsel %vm1646, %v1696, %v1697
    %v1699 = vrot.slane %v1638, 5
    %v1700 = vrot.slane %v1699, 4
    %v1701 = vrot.slane %v1639, 5
    %v1702 = vsel %vm1646, %v1700, %v1701
    %v1703 = vrot.slane %v1640, 5
    %v1704 = vrot.slane %v1703, 4
    %v1705 = vrot.slane %v1641, 5
    %v1706 = vsel %vm1646, %v1704, %v1705
    %v1707 = vrot.slane %v1642, 5
    %v1708 = vrot.slane %v1707, 4
    %v1709 = vrot.slane %v1643, 5
    %v1710 = vsel %vm1646, %v1708, %v1709
    %v1727 = vadd.f32 %v1564, %v1650
    %v1728 = vadd.f32 %v1565, %v1654
    %v1729 = vadd.f32 %v1566, %v1658
    %v1730 = vadd.f32 %v1567, %v1662
    %v1731 = vadd.f32 %v1568, %v1666
    %v1732 = vadd.f32 %v1569, %v1670
    %v1733 = vadd.f32 %v1570, %v1674
    %v1734 = vadd.f32 %v1571, %v1678
    %v1735 = vadd.f32 %v1572, %v1682
    %v1736 = vadd.f32 %v1573, %v1686
    %v1737 = vadd.f32 %v1574, %v1690
    %v1738 = vadd.f32 %v1575, %v1694
    %v1739 = vadd.f32 %v1576, %v1698
    %v1740 = vadd.f32 %v1577, %v1702
    %v1741 = vadd.f32 %v1578, %v1706
    %v1742 = vadd.f32 %v1579, %v1710
    %1743 = vst [vmem:[#allocation3] sm:$0xff] %v1727
    %1744 = vst [vmem:[#allocation3 + $0x8] sm:$0xff] %v1728
    %1745 = vst [vmem:[#allocation3 + $0x10] sm:$0xff] %v1729
    %1746 = vst [vmem:[#allocation3 + $0x18] sm:$0xff] %v1730
    %1747 = vst [vmem:[#allocation3 + $0x20] sm:$0xff] %v1731
    %1748 = vst [vmem:[#allocation3 + $0x28] sm:$0xff] %v1732
    %1749 = vst [vmem:[#allocation3 + $0x30] sm:$0xff] %v1733
    %1750 = vst [vmem:[#allocation3 + $0x38] sm:$0xff] %v1734
    %1751 = vst [vmem:[#allocation3 + $0x40] sm:$0xff] %v1735
    %1752 = vst [vmem:[#allocation3 + $0x48] sm:$0xff] %v1736
    %1753 = vst [vmem:[#allocation3 + $0x50] sm:$0xff] %v1737
    %1754 = vst [vmem:[#allocation3 + $0x58] sm:$0xff] %v1738
    %1755 = vst [vmem:[#allocation3 + $0x60] sm:$0xff] %v1739
    %1756 = vst [vmem:[#allocation3 + $0x68] sm:$0xff] %v1740
    %1757 = vst [vmem:[#allocation3 + $0x70] sm:$0xff] %v1741
    %1758 = vst [vmem:[#allocation3 + $0x78] sm:$0xff] %v1742
    %v1759 = vld [vmem:[#allocation4] sm:$0xff]
    %v1760 = vld [vmem:[#allocation4 + $0x8] sm:$0xff]
    %v1761 = vld [vmem:[#allocation4 + $0x10] sm:$0x3]
    %v1762 = vld [vmem:[#allocation4 + $0x18] sm:$0x3]
    %v1763 = vld [vmem:[#allocation4 + $0x20] sm:$0xff]
    %v1764 = vld [vmem:[#allocation4 + $0x28] sm:$0xff]
    %v1765 = vld [vmem:[#allocation4 + $0x30] sm:$0x3]
    %v1766 = vld [vmem:[#allocation4 + $0x38] sm:$0x3]
    %v1767 = vld [vmem:[#allocation4 + $0x40] sm:$0xff]
    %v1768 = vld [vmem:[#allocation4 + $0x48] sm:$0xff]
    %v1769 = vld [vmem:[#allocation4 + $0x50] sm:$0x3]
    %v1770 = vld [vmem:[#allocation4 + $0x58] sm:$0x3]
    %v1771 = vld [vmem:[#allocation4 + $0x60] sm:$0xff]
    %v1772 = vld [vmem:[#allocation4 + $0x68] sm:$0xff]
    %v1773 = vld [vmem:[#allocation4 + $0x70] sm:$0x3]
    %v1774 = vld [vmem:[#allocation4 + $0x78] sm:$0x3]
    %v1775 = vld [vmem:[#allocation4 + $0x80] sm:$0xff]
    %v1776 = vld [vmem:[#allocation4 + $0x88] sm:$0xff]
    %v1777 = vld [vmem:[#allocation4 + $0x90] sm:$0x3]
    %v1778 = vld [vmem:[#allocation4 + $0x98] sm:$0x3]
    %v1779 = vld [vmem:[#allocation4 + $0xa0] sm:$0xff]
    %v1780 = vld [vmem:[#allocation4 + $0xa8] sm:$0xff]
    %v1781 = vld [vmem:[#allocation4 + $0xb0] sm:$0x3]
    %v1782 = vld [vmem:[#allocation4 + $0xb8] sm:$0x3]
    %v1783 = vld [vmem:[#allocation4 + $0xc0] sm:$0xff]
    %v1784 = vld [vmem:[#allocation4 + $0xc8] sm:$0xff]
    %v1785 = vld [vmem:[#allocation4 + $0xd0] sm:$0x3]
    %v1786 = vld [vmem:[#allocation4 + $0xd8] sm:$0x3]
    %v1787 = vld [vmem:[#allocation4 + $0xe0] sm:$0xff]
    %v1788 = vld [vmem:[#allocation4 + $0xe8] sm:$0xff]
    %v1789 = vld [vmem:[#allocation4 + $0xf0] sm:$0x3]
    %v1790 = vld [vmem:[#allocation4 + $0xf8] sm:$0x3]
    %v1791 = vld [vmem:[#allocation4 + $0x100] sm:$0xff]
    %v1792 = vld [vmem:[#allocation4 + $0x108] sm:$0xff]
    %v1793 = vld [vmem:[#allocation4 + $0x110] sm:$0x3]
    %v1794 = vld [vmem:[#allocation4 + $0x118] sm:$0x3]
    %v1795 = vld [vmem:[#allocation4 + $0x120] sm:$0xff]
    %v1796 = vld [vmem:[#allocation4 + $0x128] sm:$0xff]
    %v1797 = vld [vmem:[#allocation4 + $0x130] sm:$0x3]
    %v1798 = vld [vmem:[#allocation4 + $0x138] sm:$0x3]
    %v1799 = vld [vmem:[#allocation4 + $0x140] sm:$0xff]
    %v1800 = vld [vmem:[#allocation4 + $0x148] sm:$0xff]
    %v1801 = vld [vmem:[#allocation4 + $0x150] sm:$0x3]
    %v1802 = vld [vmem:[#allocation4 + $0x158] sm:$0x3]
    %v1803 = vld [vmem:[#allocation4 + $0x160] sm:$0xff]
    %v1804 = vld [vmem:[#allocation4 + $0x168] sm:$0xff]
    %v1805 = vld [vmem:[#allocation4 + $0x170] sm:$0x3]
    %v1806 = vld [vmem:[#allocation4 + $0x178] sm:$0x3]
    %v1807 = vld [vmem:[#allocation4 + $0x180] sm:$0xff]
    %v1808 = vld [vmem:[#allocation4 + $0x188] sm:$0xff]
    %v1809 = vld [vmem:[#allocation4 + $0x190] sm:$0x3]
    %v1810 = vld [vmem:[#allocation4 + $0x198] sm:$0x3]
    %v1811 = vld [vmem:[#allocation4 + $0x1a0] sm:$0xff]
    %v1812 = vld [vmem:[#allocation4 + $0x1a8] sm:$0xff]
    %v1813 = vld [vmem:[#allocation4 + $0x1b0] sm:$0x3]
    %v1814 = vld [vmem:[#allocation4 + $0x1b8] sm:$0x3]
    %v1815 = vld [vmem:[#allocation4 + $0x1c0] sm:$0xff]
    %v1816 = vld [vmem:[#allocation4 + $0x1c8] sm:$0xff]
    %v1817 = vld [vmem:[#allocation4 + $0x1d0] sm:$0x3]
    %v1818 = vld [vmem:[#allocation4 + $0x1d8] sm:$0x3]
    %v1819 = vld [vmem:[#allocation4 + $0x1e0] sm:$0xff]
    %v1820 = vld [vmem:[#allocation4 + $0x1e8] sm:$0xff]
    %v1821 = vld [vmem:[#allocation4 + $0x1f0] sm:$0x3]
    %v1822 = vld [vmem:[#allocation4 + $0x1f8] sm:$0x3]
    %v1887 = vrot.slane %v360, 5
    %v1888 = vrot.slane %v1192, 5
    %v1889 = vsel %vm1644, %v1887, %v1888
    %v1890 = vrot.slane %v361, 5
    %v1891 = vrot.slane %v1193, 5
    %v1892 = vsel %vm1644, %v1890, %v1891
    %v1893 = vrot.slane %v362, 5
    %v1894 = vrot.slane %v1194, 5
    %v1895 = vsel %vm1644, %v1893, %v1894
    %v1896 = vrot.slane %v363, 5
    %v1897 = vrot.slane %v1195, 5
    %v1898 = vsel %vm1644, %v1896, %v1897
    %v1899 = vrot.slane %v364, 5
    %v1900 = vrot.slane %v1196, 5
    %v1901 = vsel %vm1644, %v1899, %v1900
    %v1902 = vrot.slane %v365, 5
    %v1903 = vrot.slane %v1197, 5
    %v1904 = vsel %vm1644, %v1902, %v1903
    %v1905 = vrot.slane %v366, 5
    %v1906 = vrot.slane %v1198, 5
    %v1907 = vsel %vm1644, %v1905, %v1906
    %v1908 = vrot.slane %v367, 5
    %v1909 = vrot.slane %v1199, 5
    %v1910 = vsel %vm1644, %v1908, %v1909
    %v1911 = vrot.slane %v368, 5
    %v1912 = vrot.slane %v1200, 5
    %v1913 = vsel %vm1644, %v1911, %v1912
    %v1914 = vrot.slane %v369, 5
    %v1915 = vrot.slane %v1201, 5
    %v1916 = vsel %vm1644, %v1914, %v1915
    %v1917 = vrot.slane %v370, 5
    %v1918 = vrot.slane %v1202, 5
    %v1919 = vsel %vm1644, %v1917, %v1918
    %v1920 = vrot.slane %v371, 5
    %v1921 = vrot.slane %v1203, 5
    %v1922 = vsel %vm1644, %v1920, %v1921
    %v1923 = vrot.slane %v372, 5
    %v1924 = vrot.slane %v1204, 5
    %v1925 = vsel %vm1644, %v1923, %v1924
    %v1926 = vrot.slane %v373, 5
    %v1927 = vrot.slane %v1205, 5
    %v1928 = vsel %vm1644, %v1926, %v1927
    %v1929 = vrot.slane %v374, 5
    %v1930 = vrot.slane %v1206, 5
    %v1931 = vsel %vm1644, %v1929, %v1930
    %v1932 = vrot.slane %v375, 5
    %v1933 = vrot.slane %v1207, 5
    %v1934 = vsel %vm1644, %v1932, %v1933
    %v1935 = vrot.slane %v376, 5
    %v1936 = vrot.slane %v1208, 5
    %v1937 = vsel %vm1644, %v1935, %v1936
    %v1938 = vrot.slane %v377, 5
    %v1939 = vrot.slane %v1209, 5
    %v1940 = vsel %vm1644, %v1938, %v1939
    %v1941 = vrot.slane %v378, 5
    %v1942 = vrot.slane %v1210, 5
    %v1943 = vsel %vm1644, %v1941, %v1942
    %v1944 = vrot.slane %v379, 5
    %v1945 = vrot.slane %v1211, 5
    %v1946 = vsel %vm1644, %v1944, %v1945
    %v1947 = vrot.slane %v380, 5
    %v1948 = vrot.slane %v1212, 5
    %v1949 = vsel %vm1644, %v1947, %v1948
    %v1950 = vrot.slane %v381, 5
    %v1951 = vrot.slane %v1213, 5
    %v1952 = vsel %vm1644, %v1950, %v1951
    %v1953 = vrot.slane %v382, 5
    %v1954 = vrot.slane %v1214, 5
    %v1955 = vsel %vm1644, %v1953, %v1954
    %v1956 = vrot.slane %v383, 5
    %v1957 = vrot.slane %v1215, 5
    %v1958 = vsel %vm1644, %v1956, %v1957
    %v1959 = vrot.slane %v384, 5
    %v1960 = vrot.slane %v1216, 5
    %v1961 = vsel %vm1644, %v1959, %v1960
    %v1962 = vrot.slane %v385, 5
    %v1963 = vrot.slane %v1217, 5
    %v1964 = vsel %vm1644, %v1962, %v1963
    %v1965 = vrot.slane %v386, 5
    %v1966 = vrot.slane %v1218, 5
    %v1967 = vsel %vm1644, %v1965, %v1966
    %v1968 = vrot.slane %v387, 5
    %v1969 = vrot.slane %v1219, 5
    %v1970 = vsel %vm1644, %v1968, %v1969
    %v1971 = vrot.slane %v388, 5
    %v1972 = vrot.slane %v1220, 5
    %v1973 = vsel %vm1644, %v1971, %v1972
    %v1974 = vrot.slane %v389, 5
    %v1975 = vrot.slane %v1221, 5
    %v1976 = vsel %vm1644, %v1974, %v1975
    %v1977 = vrot.slane %v390, 5
    %v1978 = vrot.slane %v1222, 5
    %v1979 = vsel %vm1644, %v1977, %v1978
    %v1980 = vrot.slane %v391, 5
    %v1981 = vrot.slane %v1223, 5
    %v1982 = vsel %vm1644, %v1980, %v1981
    %v2047 = vadd.f32 %v1759, %v1889
    %v2048 = vadd.f32 %v1760, %v1892
    %v2049 = vadd.f32 %v1761, %v1888
    %v2050 = vadd.f32 %v1762, %v1891
    %v2051 = vadd.f32 %v1763, %v1895
    %v2052 = vadd.f32 %v1764, %v1898
    %v2053 = vadd.f32 %v1765, %v1894
    %v2054 = vadd.f32 %v1766, %v1897
    %v2055 = vadd.f32 %v1767, %v1901
    %v2056 = vadd.f32 %v1768, %v1904
    %v2057 = vadd.f32 %v1769, %v1900
    %v2058 = vadd.f32 %v1770, %v1903
    %v2059 = vadd.f32 %v1771, %v1907
    %v2060 = vadd.f32 %v1772, %v1910
    %v2061 = vadd.f32 %v1773, %v1906
    %v2062 = vadd.f32 %v1774, %v1909
    %v2063 = vadd.f32 %v1775, %v1913
    %v2064 = vadd.f32 %v1776, %v1916
    %v2065 = vadd.f32 %v1777, %v1912
    %v2066 = vadd.f32 %v1778, %v1915
    %v2067 = vadd.f32 %v1779, %v1919
    %v2068 = vadd.f32 %v1780, %v1922
    %v2069 = vadd.f32 %v1781, %v1918
    %v2070 = vadd.f32 %v1782, %v1921
    %v2071 = vadd.f32 %v1783, %v1925
    %v2072 = vadd.f32 %v1784, %v1928
    %v2073 = vadd.f32 %v1785, %v1924
    %v2074 = vadd.f32 %v1786, %v1927
    %v2075 = vadd.f32 %v1787, %v1931
    %v2076 = vadd.f32 %v1788, %v1934
    %v2077 = vadd.f32 %v1789, %v1930
    %v2078 = vadd.f32 %v1790, %v1933
    %v2079 = vadd.f32 %v1791, %v1937
    %v2080 = vadd.f32 %v1792, %v1940
    %v2081 = vadd.f32 %v1793, %v1936
    %v2082 = vadd.f32 %v1794, %v1939
    %v2083 = vadd.f32 %v1795, %v1943
    %v2084 = vadd.f32 %v1796, %v1946
    %v2085 = vadd.f32 %v1797, %v1942
    %v2086 = vadd.f32 %v1798, %v1945
    %v2087 = vadd.f32 %v1799, %v1949
    %v2088 = vadd.f32 %v1800, %v1952
    %v2089 = vadd.f32 %v1801, %v1948
    %v2090 = vadd.f32 %v1802, %v1951
    %v2091 = vadd.f32 %v1803, %v1955
    %v2092 = vadd.f32 %v1804, %v1958
    %v2093 = vadd.f32 %v1805, %v1954
    %v2094 = vadd.f32 %v1806, %v1957
    %v2095 = vadd.f32 %v1807, %v1961
    %v2096 = vadd.f32 %v1808, %v1964
    %v2097 = vadd.f32 %v1809, %v1960
    %v2098 = vadd.f32 %v1810, %v1963
    %v2099 = vadd.f32 %v1811, %v1967
    %v2100 = vadd.f32 %v1812, %v1970
    %v2101 = vadd.f32 %v1813, %v1966
    %v2102 = vadd.f32 %v1814, %v1969
    %v2103 = vadd.f32 %v1815, %v1973
    %v2104 = vadd.f32 %v1816, %v1976
    %v2105 = vadd.f32 %v1817, %v1972
    %v2106 = vadd.f32 %v1818, %v1975
    %v2107 = vadd.f32 %v1819, %v1979
    %v2108 = vadd.f32 %v1820, %v1982
    %v2109 = vadd.f32 %v1821, %v1978
    %v2110 = vadd.f32 %v1822, %v1981
    %2111 = vst [vmem:[#allocation4] sm:$0xff] %v2047
    %2112 = vst [vmem:[#allocation4 + $0x8] sm:$0xff] %v2048
    %2113 = vst [vmem:[#allocation4 + $0x10] sm:$0x3] %v2049
    %2114 = vst [vmem:[#allocation4 + $0x18] sm:$0x3] %v2050
    %2115 = vst [vmem:[#allocation4 + $0x20] sm:$0xff] %v2051
    %2116 = vst [vmem:[#allocation4 + $0x28] sm:$0xff] %v2052
    %2117 = vst [vmem:[#allocation4 + $0x30] sm:$0x3] %v2053
    %2118 = vst [vmem:[#allocation4 + $0x38] sm:$0x3] %v2054
    %2119 = vst [vmem:[#allocation4 + $0x40] sm:$0xff] %v2055
    %2120 = vst [vmem:[#allocation4 + $0x48] sm:$0xff] %v2056
    %2121 = vst [vmem:[#allocation4 + $0x50] sm:$0x3] %v2057
    %2122 = vst [vmem:[#allocation4 + $0x58] sm:$0x3] %v2058
    %2123 = vst [vmem:[#allocation4 + $0x60] sm:$0xff] %v2059
    %2124 = vst [vmem:[#allocation4 + $0x68] sm:$0xff] %v2060
    %2125 = vst [vmem:[#allocation4 + $0x70] sm:$0x3] %v2061
    %2126 = vst [vmem:[#allocation4 + $0x78] sm:$0x3] %v2062
    %2127 = vst [vmem:[#allocation4 + $0x80] sm:$0xff] %v2063
    %2128 = vst [vmem:[#allocation4 + $0x88] sm:$0xff] %v2064
    %2129 = vst [vmem:[#allocation4 + $0x90] sm:$0x3] %v2065
    %2130 = vst [vmem:[#allocation4 + $0x98] sm:$0x3] %v2066
    %2131 = vst [vmem:[#allocation4 + $0xa0] sm:$0xff] %v2067
    %2132 = vst [vmem:[#allocation4 + $0xa8] sm:$0xff] %v2068
    %2133 = vst [vmem:[#allocation4 + $0xb0] sm:$0x3] %v2069
    %2134 = vst [vmem:[#allocation4 + $0xb8] sm:$0x3] %v2070
    %2135 = vst [vmem:[#allocation4 + $0xc0] sm:$0xff] %v2071
    %2136 = vst [vmem:[#allocation4 + $0xc8] sm:$0xff] %v2072
    %2137 = vst [vmem:[#allocation4 + $0xd0] sm:$0x3] %v2073
    %2138 = vst [vmem:[#allocation4 + $0xd8] sm:$0x3] %v2074
    %2139 = vst [vmem:[#allocation4 + $0xe0] sm:$0xff] %v2075
    %2140 = vst [vmem:[#allocation4 + $0xe8] sm:$0xff] %v2076
    %2141 = vst [vmem:[#allocation4 + $0xf0] sm:$0x3] %v2077
    %2142 = vst [vmem:[#allocation4 + $0xf8] sm:$0x3] %v2078
    %2143 = vst [vmem:[#allocation4 + $0x100] sm:$0xff] %v2079
    %2144 = vst [vmem:[#allocation4 + $0x108] sm:$0xff] %v2080
    %2145 = vst [vmem:[#allocation4 + $0x110] sm:$0x3] %v2081
    %2146 = vst [vmem:[#allocation4 + $0x118] sm:$0x3] %v2082
    %2147 = vst [vmem:[#allocation4 + $0x120] sm:$0xff] %v2083
    %2148 = vst [vmem:[#allocation4 + $0x128] sm:$0xff] %v2084
    %2149 = vst [vmem:[#allocation4 + $0x130] sm:$0x3] %v2085
    %2150 = vst [vmem:[#allocation4 + $0x138] sm:$0x3] %v2086
    %2151 = vst [vmem:[#allocation4 + $0x140] sm:$0xff] %v2087
    %2152 = vst [vmem:[#allocation4 + $0x148] sm:$0xff] %v2088
    %2153 = vst [vmem:[#allocation4 + $0x150] sm:$0x3] %v2089
    %2154 = vst [vmem:[#allocation4 + $0x158] sm:$0x3] %v2090
    %2155 = vst [vmem:[#allocation4 + $0x160] sm:$0xff] %v2091
    %2156 = vst [vmem:[#allocation4 + $0x168] sm:$0xff] %v2092
    %2157 = vst [vmem:[#allocation4 + $0x170] sm:$0x3] %v2093
    %2158 = vst [vmem:[#allocation4 + $0x178] sm:$0x3] %v2094
    %2159 = vst [vmem:[#allocation4 + $0x180] sm:$0xff] %v2095
    %2160 = vst [vmem:[#allocation4 + $0x188] sm:$0xff] %v2096
    %2161 = vst [vmem:[#allocation4 + $0x190] sm:$0x3] %v2097
    %2162 = vst [vmem:[#allocation4 + $0x198] sm:$0x3] %v2098
    %2163 = vst [vmem:[#allocation4 + $0x1a0] sm:$0xff] %v2099
    %2164 = vst [vmem:[#allocation4 + $0x1a8] sm:$0xff] %v2100
    %2165 = vst [vmem:[#allocation4 + $0x1b0] sm:$0x3] %v2101
    %2166 = vst [vmem:[#allocation4 + $0x1b8] sm:$0x3] %v2102
    %2167 = vst [vmem:[#allocation4 + $0x1c0] sm:$0xff] %v2103
    %2168 = vst [vmem:[#allocation4 + $0x1c8] sm:$0xff] %v2104
    %2169 = vst [vmem:[#allocation4 + $0x1d0] sm:$0x3] %v2105
    %2170 = vst [vmem:[#allocation4 + $0x1d8] sm:$0x3] %v2106
    %2171 = vst [vmem:[#allocation4 + $0x1e0] sm:$0xff] %v2107
    %2172 = vst [vmem:[#allocation4 + $0x1e8] sm:$0xff] %v2108
    %2173 = vst [vmem:[#allocation4 + $0x1f0] sm:$0x3] %v2109
    %2174 = vst [vmem:[#allocation4 + $0x1f8] sm:$0x3] %v2110
    // Predicated region
    $region14: #{tpu_custom_call.1} parent=1 // pred_check
      %p2175 = pneg %p62
    $region15: #{tpu_custom_call.1} parent=1 // pred_check_branch
      %2177 = sbr.rel (%p2175) target = $region17
    $region16: #{tpu_custom_call.1} parent=1 // pred_region
      %v2178 = vld [vmem:[#allocation2] sm:$0x3]
      %v2179 = vld [vmem:[#allocation2 + $0x2] sm:$0x3]
      %v2180 = vld [vmem:[#allocation2 + $0x4] sm:$0x3]
      %v2181 = vld [vmem:[#allocation2 + $0x6] sm:$0x3]
      %v2182 = vld [vmem:[#allocation2 + $0x8] sm:$0x3]
      %v2183 = vld [vmem:[#allocation2 + $0xa] sm:$0x3]
      %v2184 = vld [vmem:[#allocation2 + $0xc] sm:$0x3]
      %v2185 = vld [vmem:[#allocation2 + $0xe] sm:$0x3]
      %v2186 = vld [vmem:[#allocation2 + $0x10] sm:$0x3]
      %v2187 = vld [vmem:[#allocation2 + $0x12] sm:$0x3]
      %v2188 = vld [vmem:[#allocation2 + $0x14] sm:$0x3]
      %v2189 = vld [vmem:[#allocation2 + $0x16] sm:$0x3]
      %v2190 = vld [vmem:[#allocation2 + $0x18] sm:$0x3]
      %v2191 = vld [vmem:[#allocation2 + $0x1a] sm:$0x3]
      %v2192 = vld [vmem:[#allocation2 + $0x1c] sm:$0x3]
      %v2193 = vld [vmem:[#allocation2 + $0x1e] sm:$0x3]
      %v2210 = vlaneseq
      %v2211 = vshrl.u32 %v2210, 7
      %v2212 = vsub.s32 0, %v2211
      %v2213 = vrot.slane %v2178, %v2212
      %v2214 = vlaneseq
      %v2215 = vshrl.u32 %v2214, 7
      %v2216 = vsub.s32 1, %v2215
      %v2217 = vrot.slane %v2178, %v2216
      %v2218 = vlaneseq
      %v2219 = vshrl.u32 %v2218, 7
      %v2220 = vsub.s32 0, %v2219
      %v2221 = vrot.slane %v2179, %v2220
      %v2222 = vlaneseq
      %v2223 = vshrl.u32 %v2222, 7
      %v2224 = vsub.s32 1, %v2223
      %v2225 = vrot.slane %v2179, %v2224
      %v2226 = vlaneseq
      %v2227 = vshrl.u32 %v2226, 7
      %v2228 = vsub.s32 0, %v2227
      %v2229 = vrot.slane %v2180, %v2228
      %v2230 = vlaneseq
      %v2231 = vshrl.u32 %v2230, 7
      %v2232 = vsub.s32 1, %v2231
      %v2233 = vrot.slane %v2180, %v2232
      %v2234 = vlaneseq
      %v2235 = vshrl.u32 %v2234, 7
      %v2236 = vsub.s32 0, %v2235
      %v2237 = vrot.slane %v2181, %v2236
      %v2238 = vlaneseq
      %v2239 = vshrl.u32 %v2238, 7
      %v2240 = vsub.s32 1, %v2239
      %v2241 = vrot.slane %v2181, %v2240
      %v2242 = vlaneseq
      %v2243 = vshrl.u32 %v2242, 7
      %v2244 = vsub.s32 0, %v2243
      %v2245 = vrot.slane %v2182, %v2244
      %v2246 = vlaneseq
      %v2247 = vshrl.u32 %v2246, 7
      %v2248 = vsub.s32 1, %v2247
      %v2249 = vrot.slane %v2182, %v2248
      %v2250 = vlaneseq
      %v2251 = vshrl.u32 %v2250, 7
      %v2252 = vsub.s32 0, %v2251
      %v2253 = vrot.slane %v2183, %v2252
      %v2254 = vlaneseq
      %v2255 = vshrl.u32 %v2254, 7
      %v2256 = vsub.s32 1, %v2255
      %v2257 = vrot.slane %v2183, %v2256
      %v2258 = vlaneseq
      %v2259 = vshrl.u32 %v2258, 7
      %v2260 = vsub.s32 0, %v2259
      %v2261 = vrot.slane %v2184, %v2260
      %v2262 = vlaneseq
      %v2263 = vshrl.u32 %v2262, 7
      %v2264 = vsub.s32 1, %v2263
      %v2265 = vrot.slane %v2184, %v2264
      %v2266 = vlaneseq
      %v2267 = vshrl.u32 %v2266, 7
      %v2268 = vsub.s32 0, %v2267
      %v2269 = vrot.slane %v2185, %v2268
      %v2270 = vlaneseq
      %v2271 = vshrl.u32 %v2270, 7
      %v2272 = vsub.s32 1, %v2271
      %v2273 = vrot.slane %v2185, %v2272
      %v2274 = vlaneseq
      %v2275 = vshrl.u32 %v2274, 7
      %v2276 = vsub.s32 0, %v2275
      %v2277 = vrot.slane %v2186, %v2276
      %v2278 = vlaneseq
      %v2279 = vshrl.u32 %v2278, 7
      %v2280 = vsub.s32 1, %v2279
      %v2281 = vrot.slane %v2186, %v2280
      %v2282 = vlaneseq
      %v2283 = vshrl.u32 %v2282, 7
      %v2284 = vsub.s32 0, %v2283
      %v2285 = vrot.slane %v2187, %v2284
      %v2286 = vlaneseq
      %v2287 = vshrl.u32 %v2286, 7
      %v2288 = vsub.s32 1, %v2287
      %v2289 = vrot.slane %v2187, %v2288
      %v2290 = vlaneseq
      %v2291 = vshrl.u32 %v2290, 7
      %v2292 = vsub.s32 0, %v2291
      %v2293 = vrot.slane %v2188, %v2292
      %v2294 = vlaneseq
      %v2295 = vshrl.u32 %v2294, 7
      %v2296 = vsub.s32 1, %v2295
      %v2297 = vrot.slane %v2188, %v2296
      %v2298 = vlaneseq
      %v2299 = vshrl.u32 %v2298, 7
      %v2300 = vsub.s32 0, %v2299
      %v2301 = vrot.slane %v2189, %v2300
      %v2302 = vlaneseq
      %v2303 = vshrl.u32 %v2302, 7
      %v2304 = vsub.s32 1, %v2303
      %v2305 = vrot.slane %v2189, %v2304
      %v2306 = vlaneseq
      %v2307 = vshrl.u32 %v2306, 7
      %v2308 = vsub.s32 0, %v2307
      %v2309 = vrot.slane %v2190, %v2308
      %v2310 = vlaneseq
      %v2311 = vshrl.u32 %v2310, 7
      %v2312 = vsub.s32 1, %v2311
      %v2313 = vrot.slane %v2190, %v2312
      %v2314 = vlaneseq
      %v2315 = vshrl.u32 %v2314, 7
      %v2316 = vsub.s32 0, %v2315
      %v2317 = vrot.slane %v2191, %v2316
      %v2318 = vlaneseq
      %v2319 = vshrl.u32 %v2318, 7
      %v2320 = vsub.s32 1, %v2319
      %v2321 = vrot.slane %v2191, %v2320
      %v2322 = vlaneseq
      %v2323 = vshrl.u32 %v2322, 7
      %v2324 = vsub.s32 0, %v2323
      %v2325 = vrot.slane %v2192, %v2324
      %v2326 = vlaneseq
      %v2327 = vshrl.u32 %v2326, 7
      %v2328 = vsub.s32 1, %v2327
      %v2329 = vrot.slane %v2192, %v2328
      %v2330 = vlaneseq
      %v2331 = vshrl.u32 %v2330, 7
      %v2332 = vsub.s32 0, %v2331
      %v2333 = vrot.slane %v2193, %v2332
      %v2334 = vlaneseq
      %v2335 = vshrl.u32 %v2334, 7
      %v2336 = vsub.s32 1, %v2335
      %v2337 = vrot.slane %v2193, %v2336
      %vm2370 = vcmask 1040384
      %v2371 = vsel %vm2370, %v2213, 0.0
      %v2372 = vsel %vm2370, %v2217, 0.0
      %v2373 = vadd.f32 %v2371, %v2372
      %v2374 = vsel %vm2370, %v2221, 0.0
      %v2375 = vadd.f32 %v2373, %v2374
      %v2376 = vsel %vm2370, %v2225, 0.0
      %v2377 = vadd.f32 %v2375, %v2376
      %v2378 = vsel %vm2370, %v2229, 0.0
      %v2379 = vadd.f32 %v2377, %v2378
      %v2380 = vsel %vm2370, %v2233, 0.0
      %v2381 = vadd.f32 %v2379, %v2380
      %v2382 = vsel %vm2370, %v2237, 0.0
      %v2383 = vadd.f32 %v2381, %v2382
      %v2384 = vsel %vm2370, %v2241, 0.0
      %v2385 = vadd.f32 %v2383, %v2384
      %v2386 = vsel %vm2370, %v2245, 0.0
      %v2387 = vadd.f32 %v2385, %v2386
      %v2388 = vsel %vm2370, %v2249, 0.0
      %v2389 = vadd.f32 %v2387, %v2388
      %v2390 = vsel %vm2370, %v2253, 0.0
      %v2391 = vadd.f32 %v2389, %v2390
      %v2392 = vsel %vm2370, %v2257, 0.0
      %v2393 = vadd.f32 %v2391, %v2392
      %v2394 = vsel %vm2370, %v2261, 0.0
      %v2395 = vadd.f32 %v2393, %v2394
      %v2396 = vsel %vm2370, %v2265, 0.0
      %v2397 = vadd.f32 %v2395, %v2396
      %v2398 = vsel %vm2370, %v2269, 0.0
      %v2399 = vadd.f32 %v2397, %v2398
      %v2400 = vsel %vm2370, %v2273, 0.0
      %v2401 = vadd.f32 %v2399, %v2400
      %v2402 = vsel %vm2370, %v2277, 0.0
      %v2403 = vadd.f32 %v2401, %v2402
      %v2404 = vsel %vm2370, %v2281, 0.0
      %v2405 = vadd.f32 %v2403, %v2404
      %v2406 = vsel %vm2370, %v2285, 0.0
      %v2407 = vadd.f32 %v2405, %v2406
      %v2408 = vsel %vm2370, %v2289, 0.0
      %v2409 = vadd.f32 %v2407, %v2408
      %v2410 = vsel %vm2370, %v2293, 0.0
      %v2411 = vadd.f32 %v2409, %v2410
      %v2412 = vsel %vm2370, %v2297, 0.0
      %v2413 = vadd.f32 %v2411, %v2412
      %v2414 = vsel %vm2370, %v2301, 0.0
      %v2415 = vadd.f32 %v2413, %v2414
      %v2416 = vsel %vm2370, %v2305, 0.0
      %v2417 = vadd.f32 %v2415, %v2416
      %v2418 = vsel %vm2370, %v2309, 0.0
      %v2419 = vadd.f32 %v2417, %v2418
      %v2420 = vsel %vm2370, %v2313, 0.0
      %v2421 = vadd.f32 %v2419, %v2420
      %v2422 = vsel %vm2370, %v2317, 0.0
      %v2423 = vadd.f32 %v2421, %v2422
      %v2424 = vsel %vm2370, %v2321, 0.0
      %v2425 = vadd.f32 %v2423, %v2424
      %v2426 = vsel %vm2370, %v2325, 0.0
      %v2427 = vadd.f32 %v2425, %v2426
      %v2428 = vsel %vm2370, %v2329, 0.0
      %v2429 = vadd.f32 %v2427, %v2428
      %v2430 = vsel %vm2370, %v2333, 0.0
      %v2431 = vadd.f32 %v2429, %v2430
      %v2432 = vsel %vm2370, %v2337, 0.0
      %v2433 = vadd.f32 %v2431, %v2432
      %2434 = vadd.xlane.f32.xlu0 %v2433
      %v2435 = vpop.xlane.xlu0 %2434
      %v2436 = vrot.slane %v2435, 4
      %v2437 = vadd.f32 %v2435, %v2436
      %v2438 = vrot.slane %v2437, 2
      %v2439 = vadd.f32 %v2437, %v2438
      %v2440 = vrot.slane %v2439, 1
      %v2441 = vadd.f32 %v2439, %v2440
      %s2442 = vtos %v2441
      %v2443 = vld [vmem:[#allocation3] sm:$0xff]
      %v2444 = vld [vmem:[#allocation3 + $0x8] sm:$0xff]
      %v2445 = vld [vmem:[#allocation3 + $0x10] sm:$0xff]
      %v2446 = vld [vmem:[#allocation3 + $0x18] sm:$0xff]
      %v2447 = vld [vmem:[#allocation3 + $0x20] sm:$0xff]
      %v2448 = vld [vmem:[#allocation3 + $0x28] sm:$0xff]
      %v2449 = vld [vmem:[#allocation3 + $0x30] sm:$0xff]
      %v2450 = vld [vmem:[#allocation3 + $0x38] sm:$0xff]
      %v2451 = vld [vmem:[#allocation3 + $0x40] sm:$0xff]
      %v2452 = vld [vmem:[#allocation3 + $0x48] sm:$0xff]
      %v2453 = vld [vmem:[#allocation3 + $0x50] sm:$0xff]
      %v2454 = vld [vmem:[#allocation3 + $0x58] sm:$0xff]
      %v2455 = vld [vmem:[#allocation3 + $0x60] sm:$0xff]
      %v2456 = vld [vmem:[#allocation3 + $0x68] sm:$0xff]
      %v2457 = vld [vmem:[#allocation3 + $0x70] sm:$0xff]
      %v2458 = vld [vmem:[#allocation3 + $0x78] sm:$0xff]
      %v2475 = vcombine.high %v2443, %v2443
      %v2476 = vcombine.high %v2444, %v2444
      %v2477 = vcombine.high %v2445, %v2445
      %v2478 = vcombine.high %v2446, %v2446
      %v2479 = vcombine.high %v2447, %v2447
      %v2480 = vcombine.high %v2448, %v2448
      %v2481 = vcombine.high %v2449, %v2449
      %v2482 = vcombine.high %v2450, %v2450
      %v2483 = vcombine.high %v2451, %v2451
      %v2484 = vcombine.high %v2452, %v2452
      %v2485 = vcombine.high %v2453, %v2453
      %v2486 = vcombine.high %v2454, %v2454
      %v2487 = vcombine.high %v2455, %v2455
      %v2488 = vcombine.high %v2456, %v2456
      %v2489 = vcombine.high %v2457, %v2457
      %v2490 = vcombine.high %v2458, %v2458
      %vm2507 = vcmask 1043456
      %v2508 = vsel %vm2507, %v2443, 0.0
      %v2509 = vsel %vm2507, %v2475, 0.0
      %v2510 = vadd.f32 %v2508, %v2509
      %v2511 = vsel %vm2507, %v2444, 0.0
      %v2512 = vadd.f32 %v2510, %v2511
      %v2513 = vsel %vm2507, %v2476, 0.0
      %v2514 = vadd.f32 %v2512, %v2513
      %v2515 = vsel %vm2507, %v2445, 0.0
      %v2516 = vadd.f32 %v2514, %v2515
      %v2517 = vsel %vm2507, %v2477, 0.0
      %v2518 = vadd.f32 %v2516, %v2517
      %v2519 = vsel %vm2507, %v2446, 0.0
      %v2520 = vadd.f32 %v2518, %v2519
      %v2521 = vsel %vm2507, %v2478, 0.0
      %v2522 = vadd.f32 %v2520, %v2521
      %v2523 = vsel %vm2507, %v2447, 0.0
      %v2524 = vadd.f32 %v2522, %v2523
      %v2525 = vsel %vm2507, %v2479, 0.0
      %v2526 = vadd.f32 %v2524, %v2525
      %v2527 = vsel %vm2507, %v2448, 0.0
      %v2528 = vadd.f32 %v2526, %v2527
      %v2529 = vsel %vm2507, %v2480, 0.0
      %v2530 = vadd.f32 %v2528, %v2529
      %v2531 = vsel %vm2507, %v2449, 0.0
      %v2532 = vadd.f32 %v2530, %v2531
      %v2533 = vsel %vm2507, %v2481, 0.0
      %v2534 = vadd.f32 %v2532, %v2533
      %v2535 = vsel %vm2507, %v2450, 0.0
      %v2536 = vadd.f32 %v2534, %v2535
      %v2537 = vsel %vm2507, %v2482, 0.0
      %v2538 = vadd.f32 %v2536, %v2537
      %v2539 = vsel %vm2507, %v2451, 0.0
      %v2540 = vadd.f32 %v2538, %v2539
      %v2541 = vsel %vm2507, %v2483, 0.0
      %v2542 = vadd.f32 %v2540, %v2541
      %v2543 = vsel %vm2507, %v2452, 0.0
      %v2544 = vadd.f32 %v2542, %v2543
      %v2545 = vsel %vm2507, %v2484, 0.0
      %v2546 = vadd.f32 %v2544, %v2545
      %v2547 = vsel %vm2507, %v2453, 0.0
      %v2548 = vadd.f32 %v2546, %v2547
      %v2549 = vsel %vm2507, %v2485, 0.0
      %v2550 = vadd.f32 %v2548, %v2549
      %v2551 = vsel %vm2507, %v2454, 0.0
      %v2552 = vadd.f32 %v2550, %v2551
      %v2553 = vsel %vm2507, %v2486, 0.0
      %v2554 = vadd.f32 %v2552, %v2553
      %v2555 = vsel %vm2507, %v2455, 0.0
      %v2556 = vadd.f32 %v2554, %v2555
      %v2557 = vsel %vm2507, %v2487, 0.0
      %v2558 = vadd.f32 %v2556, %v2557
      %v2559 = vsel %vm2507, %v2456, 0.0
      %v2560 = vadd.f32 %v2558, %v2559
      %v2561 = vsel %vm2507, %v2488, 0.0
      %v2562 = vadd.f32 %v2560, %v2561
      %v2563 = vsel %vm2507, %v2457, 0.0
      %v2564 = vadd.f32 %v2562, %v2563
      %v2565 = vsel %vm2507, %v2489, 0.0
      %v2566 = vadd.f32 %v2564, %v2565
      %v2567 = vsel %vm2507, %v2458, 0.0
      %v2568 = vadd.f32 %v2566, %v2567
      %v2569 = vsel %vm2507, %v2490, 0.0
      %v2570 = vadd.f32 %v2568, %v2569
      %2571 = vadd.xlane.f32.xlu0 %v2570
      %v2572 = vpop.xlane.xlu0 %2571
      %v2573 = vrot.slane %v2572, 4
      %v2574 = vadd.f32 %v2572, %v2573
      %v2575 = vrot.slane %v2574, 2
      %v2576 = vadd.f32 %v2574, %v2575
      %v2577 = vrot.slane %v2576, 1
      %v2578 = vadd.f32 %v2576, %v2577
      %s2579 = vtos %v2578
      %s2580 = sadd.f32 %s2442, %s2579
      %v2581 = vld [vmem:[#allocation4] sm:$0xff]
      %v2582 = vld [vmem:[#allocation4 + $0x8] sm:$0xff]
      %v2583 = vld [vmem:[#allocation4 + $0x10] sm:$0x3]
      %v2584 = vld [vmem:[#allocation4 + $0x18] sm:$0x3]
      %v2585 = vld [vmem:[#allocation4 + $0x20] sm:$0xff]
      %v2586 = vld [vmem:[#allocation4 + $0x28] sm:$0xff]
      %v2587 = vld [vmem:[#allocation4 + $0x30] sm:$0x3]
      %v2588 = vld [vmem:[#allocation4 + $0x38] sm:$0x3]
      %v2589 = vld [vmem:[#allocation4 + $0x40] sm:$0xff]
      %v2590 = vld [vmem:[#allocation4 + $0x48] sm:$0xff]
      %v2591 = vld [vmem:[#allocation4 + $0x50] sm:$0x3]
      %v2592 = vld [vmem:[#allocation4 + $0x58] sm:$0x3]
      %v2593 = vld [vmem:[#allocation4 + $0x60] sm:$0xff]
      %v2594 = vld [vmem:[#allocation4 + $0x68] sm:$0xff]
      %v2595 = vld [vmem:[#allocation4 + $0x70] sm:$0x3]
      %v2596 = vld [vmem:[#allocation4 + $0x78] sm:$0x3]
      %v2597 = vld [vmem:[#allocation4 + $0x80] sm:$0xff]
      %v2598 = vld [vmem:[#allocation4 + $0x88] sm:$0xff]
      %v2599 = vld [vmem:[#allocation4 + $0x90] sm:$0x3]
      %v2600 = vld [vmem:[#allocation4 + $0x98] sm:$0x3]
      %v2601 = vld [vmem:[#allocation4 + $0xa0] sm:$0xff]
      %v2602 = vld [vmem:[#allocation4 + $0xa8] sm:$0xff]
      %v2603 = vld [vmem:[#allocation4 + $0xb0] sm:$0x3]
      %v2604 = vld [vmem:[#allocation4 + $0xb8] sm:$0x3]
      %v2605 = vld [vmem:[#allocation4 + $0xc0] sm:$0xff]
      %v2606 = vld [vmem:[#allocation4 + $0xc8] sm:$0xff]
      %v2607 = vld [vmem:[#allocation4 + $0xd0] sm:$0x3]
      %v2608 = vld [vmem:[#allocation4 + $0xd8] sm:$0x3]
      %v2609 = vld [vmem:[#allocation4 + $0xe0] sm:$0xff]
      %v2610 = vld [vmem:[#allocation4 + $0xe8] sm:$0xff]
      %v2611 = vld [vmem:[#allocation4 + $0xf0] sm:$0x3]
      %v2612 = vld [vmem:[#allocation4 + $0xf8] sm:$0x3]
      %v2613 = vld [vmem:[#allocation4 + $0x100] sm:$0xff]
      %v2614 = vld [vmem:[#allocation4 + $0x108] sm:$0xff]
      %v2615 = vld [vmem:[#allocation4 + $0x110] sm:$0x3]
      %v2616 = vld [vmem:[#allocation4 + $0x118] sm:$0x3]
      %v2617 = vld [vmem:[#allocation4 + $0x120] sm:$0xff]
      %v2618 = vld [vmem:[#allocation4 + $0x128] sm:$0xff]
      %v2619 = vld [vmem:[#allocation4 + $0x130] sm:$0x3]
      %v2620 = vld [vmem:[#allocation4 + $0x138] sm:$0x3]
      %v2621 = vld [vmem:[#allocation4 + $0x140] sm:$0xff]
      %v2622 = vld [vmem:[#allocation4 + $0x148] sm:$0xff]
      %v2623 = vld [vmem:[#allocation4 + $0x150] sm:$0x3]
      %v2624 = vld [vmem:[#allocation4 + $0x158] sm:$0x3]
      %v2625 = vld [vmem:[#allocation4 + $0x160] sm:$0xff]
      %v2626 = vld [vmem:[#allocation4 + $0x168] sm:$0xff]
      %v2627 = vld [vmem:[#allocation4 + $0x170] sm:$0x3]
      %v2628 = vld [vmem:[#allocation4 + $0x178] sm:$0x3]
      %v2629 = vld [vmem:[#allocation4 + $0x180] sm:$0xff]
      %v2630 = vld [vmem:[#allocation4 + $0x188] sm:$0xff]
      %v2631 = vld [vmem:[#allocation4 + $0x190] sm:$0x3]
      %v2632 = vld [vmem:[#allocation4 + $0x198] sm:$0x3]
      %v2633 = vld [vmem:[#allocation4 + $0x1a0] sm:$0xff]
      %v2634 = vld [vmem:[#allocation4 + $0x1a8] sm:$0xff]
      %v2635 = vld [vmem:[#allocation4 + $0x1b0] sm:$0x3]
      %v2636 = vld [vmem:[#allocation4 + $0x1b8] sm:$0x3]
      %v2637 = vld [vmem:[#allocation4 + $0x1c0] sm:$0xff]
      %v2638 = vld [vmem:[#allocation4 + $0x1c8] sm:$0xff]
      %v2639 = vld [vmem:[#allocation4 + $0x1d0] sm:$0x3]
      %v2640 = vld [vmem:[#allocation4 + $0x1d8] sm:$0x3]
      %v2641 = vld [vmem:[#allocation4 + $0x1e0] sm:$0xff]
      %v2642 = vld [vmem:[#allocation4 + $0x1e8] sm:$0xff]
      %v2643 = vld [vmem:[#allocation4 + $0x1f0] sm:$0x3]
      %v2644 = vld [vmem:[#allocation4 + $0x1f8] sm:$0x3]
      %v2645 = vadd.f32 %v2581, %v2582
      %vm2646 = vcmask 1041408
      %v2647 = vsel %vm2646, %v2583, 0.0
      %v2648 = vadd.f32 %v2645, %v2647
      %v2649 = vsel %vm2646, %v2584, 0.0
      %v2650 = vadd.f32 %v2648, %v2649
      %v2651 = vadd.f32 %v2650, %v2585
      %v2652 = vadd.f32 %v2651, %v2586
      %v2653 = vsel %vm2646, %v2587, 0.0
      %v2654 = vadd.f32 %v2652, %v2653
      %v2655 = vsel %vm2646, %v2588, 0.0
      %v2656 = vadd.f32 %v2654, %v2655
      %v2657 = vadd.f32 %v2656, %v2589
      %v2658 = vadd.f32 %v2657, %v2590
      %v2659 = vsel %vm2646, %v2591, 0.0
      %v2660 = vadd.f32 %v2658, %v2659
      %v2661 = vsel %vm2646, %v2592, 0.0
      %v2662 = vadd.f32 %v2660, %v2661
      %v2663 = vadd.f32 %v2662, %v2593
      %v2664 = vadd.f32 %v2663, %v2594
      %v2665 = vsel %vm2646, %v2595, 0.0
      %v2666 = vadd.f32 %v2664, %v2665
      %v2667 = vsel %vm2646, %v2596, 0.0
      %v2668 = vadd.f32 %v2666, %v2667
      %v2669 = vadd.f32 %v2668, %v2597
      %v2670 = vadd.f32 %v2669, %v2598
      %v2671 = vsel %vm2646, %v2599, 0.0
      %v2672 = vadd.f32 %v2670, %v2671
      %v2673 = vsel %vm2646, %v2600, 0.0
      %v2674 = vadd.f32 %v2672, %v2673
      %v2675 = vadd.f32 %v2674, %v2601
      %v2676 = vadd.f32 %v2675, %v2602
      %v2677 = vsel %vm2646, %v2603, 0.0
      %v2678 = vadd.f32 %v2676, %v2677
      %v2679 = vsel %vm2646, %v2604, 0.0
      %v2680 = vadd.f32 %v2678, %v2679
      %v2681 = vadd.f32 %v2680, %v2605
      %v2682 = vadd.f32 %v2681, %v2606
      %v2683 = vsel %vm2646, %v2607, 0.0
      %v2684 = vadd.f32 %v2682, %v2683
      %v2685 = vsel %vm2646, %v2608, 0.0
      %v2686 = vadd.f32 %v2684, %v2685
      %v2687 = vadd.f32 %v2686, %v2609
      %v2688 = vadd.f32 %v2687, %v2610
      %v2689 = vsel %vm2646, %v2611, 0.0
      %v2690 = vadd.f32 %v2688, %v2689
      %v2691 = vsel %vm2646, %v2612, 0.0
      %v2692 = vadd.f32 %v2690, %v2691
      %v2693 = vadd.f32 %v2692, %v2613
      %v2694 = vadd.f32 %v2693, %v2614
      %v2695 = vsel %vm2646, %v2615, 0.0
      %v2696 = vadd.f32 %v2694, %v2695
      %v2697 = vsel %vm2646, %v2616, 0.0
      %v2698 = vadd.f32 %v2696, %v2697
      %v2699 = vadd.f32 %v2698, %v2617
      %v2700 = vadd.f32 %v2699, %v2618
      %v2701 = vsel %vm2646, %v2619, 0.0
      %v2702 = vadd.f32 %v2700, %v2701
      %v2703 = vsel %vm2646, %v2620, 0.0
      %v2704 = vadd.f32 %v2702, %v2703
      %v2705 = vadd.f32 %v2704, %v2621
      %v2706 = vadd.f32 %v2705, %v2622
      %v2707 = vsel %vm2646, %v2623, 0.0
      %v2708 = vadd.f32 %v2706, %v2707
      %v2709 = vsel %vm2646, %v2624, 0.0
      %v2710 = vadd.f32 %v2708, %v2709
      %v2711 = vadd.f32 %v2710, %v2625
      %v2712 = vadd.f32 %v2711, %v2626
      %v2713 = vsel %vm2646, %v2627, 0.0
      %v2714 = vadd.f32 %v2712, %v2713
      %v2715 = vsel %vm2646, %v2628, 0.0
      %v2716 = vadd.f32 %v2714, %v2715
      %v2717 = vadd.f32 %v2716, %v2629
      %v2718 = vadd.f32 %v2717, %v2630
      %v2719 = vsel %vm2646, %v2631, 0.0
      %v2720 = vadd.f32 %v2718, %v2719
      %v2721 = vsel %vm2646, %v2632, 0.0
      %v2722 = vadd.f32 %v2720, %v2721
      %v2723 = vadd.f32 %v2722, %v2633
      %v2724 = vadd.f32 %v2723, %v2634
      %v2725 = vsel %vm2646, %v2635, 0.0
      %v2726 = vadd.f32 %v2724, %v2725
      %v2727 = vsel %vm2646, %v2636, 0.0
      %v2728 = vadd.f32 %v2726, %v2727
      %v2729 = vadd.f32 %v2728, %v2637
      %v2730 = vadd.f32 %v2729, %v2638
      %v2731 = vsel %vm2646, %v2639, 0.0
      %v2732 = vadd.f32 %v2730, %v2731
      %v2733 = vsel %vm2646, %v2640, 0.0
      %v2734 = vadd.f32 %v2732, %v2733
      %v2735 = vadd.f32 %v2734, %v2641
      %v2736 = vadd.f32 %v2735, %v2642
      %v2737 = vsel %vm2646, %v2643, 0.0
      %v2738 = vadd.f32 %v2736, %v2737
      %v2739 = vsel %vm2646, %v2644, 0.0
      %v2740 = vadd.f32 %v2738, %v2739
      %2741 = vadd.xlane.f32.xlu0 %v2740
      %v2742 = vpop.xlane.xlu0 %2741
      %v2743 = vrot.slane %v2742, 4
      %v2744 = vadd.f32 %v2742, %v2743
      %v2745 = vrot.slane %v2744, 2
      %v2746 = vadd.f32 %v2744, %v2745
      %v2747 = vrot.slane %v2746, 1
      %v2748 = vadd.f32 %v2746, %v2747
      %s2749 = vtos %v2748
      %s2750 = sadd.f32 %s2580, %s2749
      %v2751 = vstv %s2750
      %v2752 = vadd.f32 %v2751, 0.0
      %2753 = vst [vmem:[#allocation5] sm:$0xff] %v2752
    $region17: #{tpu_custom_call.1} parent=1 // pred_fallthru
      _
    // Predicated region
    $region18: #{tpu_custom_call.1} parent=1 // pred_check
      _
    $region19: #{tpu_custom_call.1} parent=1 // pred_check_branch
      %2755 = sbr.rel (0) target = $region21
    $region20: #{tpu_custom_call.1} parent=1 // pred_region
      %s2757 = ssub.s32 128, 128
      %2758 = vsyncadd [#allocation6], %s2757
      %s2760 = sshll.u32 [#allocation5], 4
      %s2761 = int_to_ptr.vmem [resolvable:$true] %s2760
      %2763 = dma.vmem_to_hbm [thread:$0]  %s2761, 128, %s2, [#allocation6]
    $region21: #{tpu_custom_call.1} parent=1 // pred_fallthru
      _
    // Predicated region
    $region22: #{tpu_custom_call.1} parent=1 // pred_check
      _
    $region23: #{tpu_custom_call.1} parent=1 // pred_check_branch
      %2765 = sbr.rel (0) target = $region25
    $region24: #{tpu_custom_call.1} parent=1 // pred_region
      %2766 = dma.done [#allocation6], 128
    $region25: #{tpu_custom_call.1} parent=1 // pred_fallthru
      _
    %2767 = vsyncpa [#allocation6], 1

</llo_original>
